<compile_context>
chip_gen: v6e
topology: v6e:2x2x1
jax: 0.10.0
libtpu: 0.0.40
codegen_flags: <defaults>
</compile_context>

<pallas_src>
import functools

import jax
import jax.numpy as jnp
import numpy as np
from jax.experimental import pallas as pl
from jax.experimental.pallas import tpu as pltpu

EPS = 1e-5                    # PyTorch BatchNorm1d default eps
IN_F = 8                      # flattened input features
PAD_F = 16                    # hidden feature rows padded to 16 (widest layer)
N_LAYERS = 4
LAYER_DIMS = [(16, 8), (8, 16), (4, 8), (1, 4)]   # (out, in) per nn.Linear

# Packed parameter slab (4, 16, 32): cols 0:16 weight (zero-padded to 16x16,
# layer 0 uses cols 0:8), col 16 bias, col 17 gamma, col 18 beta.  Bias / gamma /
# beta are zero on padded rows, which keeps padded rows exactly zero through
# ReLU and BatchNorm (var=0, gamma=0 -> scale=0, shift=0).
B_COL, G_COL, BE_COL = 16, 17, 18
SLAB_COLS = 32


def _mlp_kernel(x_ref, p_ref, o_ref, h_ref, sum1_ref, sumsq1_ref,
                *, batch, tile, n_tiles):
    """x_ref: (TB, 8) natural-layout input tile (streamed, double-buffered).
    p_ref:   (4, 16, 32) packed parameter slab (VMEM resident).
    o_ref:   (1, B) lane-dense sigmoid output (written on the last step).
    h_ref:   (n_tiles, 16, TB) resident activations, features x batch-on-lanes.
    sum1_ref/sumsq1_ref: (16, 1) cross-tile BatchNorm-1 statistics."""
    i = pl.program_id(0)

    @pl.when(i == 0)
    def _init():
        sum1_ref[...] = jnp.zeros_like(sum1_ref)
        sumsq1_ref[...] = jnp.zeros_like(sumsq1_ref)

    # ---- Phase 1 (every grid step): Linear(8,16) + ReLU on this tile. -------
    # Transpose of the (TB, 8) tile is folded into a transposed-RHS contraction
    # (same dimension_numbers pattern as q @ k^T in flash attention).
    w1 = p_ref[0, :, 0:IN_F]                      # (16, 8)
    b1 = p_ref[0, :, B_COL:B_COL + 1]             # (16, 1)
    h1 = jax.lax.dot_general(w1, x_ref[...], (((1,), (1,)), ((), ())),
                             preferred_element_type=jnp.float32)   # (16, TB)
    h1 = jnp.maximum(h1 + b1, 0.0)

    h_ref[i] = h1                                 # park tile in resident scratch
    sum1_ref[...] += jnp.sum(h1, axis=1, keepdims=True)            # BN1 stats:
    sumsq1_ref[...] += jnp.sum(h1 * h1, axis=1, keepdims=True)     # sum, sum sq

    # ---- Phase 2 (last grid step): BN1..BN3 + layers 2..4 + sigmoid. --------
    @pl.when(i == pl.num_programs(0) - 1)
    def _tail():
        inv_b = 1.0 / batch

        def bn_scale_shift(s, ss, gamma, beta):
            mu = s * inv_b
            var = jnp.maximum(ss * inv_b - mu * mu, 0.0)   # E[h^2] - mu^2
            scale = gamma * jax.lax.rsqrt(var + EPS)
            return scale, beta - mu * scale                # normalize: h*scale+shift

        def layer_params(layer):
            p = p_ref[layer]                               # (16, 32)
            return (p[:, 0:PAD_F], p[:, B_COL:B_COL + 1],
                    p[:, G_COL:G_COL + 1], p[:, BE_COL:BE_COL + 1])

        scale, shift = bn_scale_shift(
            sum1_ref[...], sumsq1_ref[...],
            p_ref[0, :, G_COL:G_COL + 1], p_ref[0, :, BE_COL:BE_COL + 1])

        # Hidden blocks 2 and 3: finish the previous BN, Linear + ReLU, gather
        # whole-batch stats for the next BN.  n_tiles is a small Python int,
        # so the per-tile loop is statically unrolled on the resident scratch.
        for layer in (1, 2):
            w, b, g, be = layer_params(layer)
            s = jnp.zeros((PAD_F, 1), jnp.float32)
            ss = jnp.zeros((PAD_F, 1), jnp.float32)
            for t in range(n_tiles):
                h = h_ref[t] * scale + shift               # previous BN (2 VPU ops)
                h = jnp.maximum(
                    jnp.dot(w, h, preferred_element_type=jnp.float32) + b, 0.0)
                h_ref[t] = h                               # reuse resident slab
                s = s + jnp.sum(h, axis=1, keepdims=True)
                ss = ss + jnp.sum(h * h, axis=1, keepdims=True)
            scale, shift = bn_scale_shift(s, ss, g, be)

        # Final block: BN3 + Linear(4,1) + sigmoid (only row 0 of the padded
        # weight is real); lane-dense (1, TB) output stores.
        w4, b4, _, _ = layer_params(3)
        for t in range(n_tiles):
            h = h_ref[t] * scale + shift
            z = jnp.dot(w4, h, preferred_element_type=jnp.float32) + b4
            o_ref[:, t * tile:(t + 1) * tile] = jax.nn.sigmoid(z[0:1, :])


def _pick_tile(batch):
    for tb in (512, 256, 128):        # lane-dense tiles; 512 ~ HBM-roofline sweet spot
        if batch % tb == 0:
            return tb
    return batch                      # small / ragged batch: single whole-batch tile


def pack_params(params):
    """One-time (init-time), host-side packing of the 14 PyTorch-layout tensors
    into a single zero-padded (4, 16, 32) f32 slab (never re-traced per call)."""
    (w1, b1, g1, be1, w2, b2, g2, be2, w3, b3, g3, be3, w4, b4) = params
    ws, bs = [w1, w2, w3, w4], [b1, b2, b3, b4]
    gs, bes = [g1, g2, g3, None], [be1, be2, be3, None]
    slab = np.zeros((N_LAYERS, PAD_F, SLAB_COLS), np.float32)
    for layer, (d_out, d_in) in enumerate(LAYER_DIMS):
        slab[layer, :d_out, :d_in] = np.asarray(ws[layer], np.float32)
        slab[layer, :d_out, B_COL] = np.asarray(bs[layer], np.float32)
        if gs[layer] is not None:
            slab[layer, :d_out, G_COL] = np.asarray(gs[layer], np.float32)
            slab[layer, :d_out, BE_COL] = np.asarray(bes[layer], np.float32)
    return jnp.asarray(slab)


def network_sequential_forward(x, pslab):
    """x: (B, ...) flattening to (B, 8); pslab: packed (4, 16, 32) param slab.
    Returns (B, 1) f32 matching PyTorch training-mode forward semantics."""
    batch = x.shape[0]
    x2d = x.reshape(batch, -1).astype(jnp.float32)    # nn.Flatten(); no transpose/pad
    assert x2d.shape[1] == IN_F, "flattened feature dim must be 8"

    tile = _pick_tile(batch)
    n_tiles = batch // tile

    # Explicit VMEM budget (review: do not rely on per-chip scoped defaults);
    # capped at the 64 MiB physical VMEM of a v7x TensorCore.
    need = (batch * PAD_F * 4             # resident activation scratch
            + 2 * tile * 128 * 4          # double-buffered lane-padded x tiles
            + 2 * N_LAYERS * PAD_F * SLAB_COLS * 4
            + 2 * max(batch, 128) * 4     # (1, B) output block
            + (4 << 20))                  # headroom for temporaries / compiler
    vmem_limit = int(min(64 << 20, max(32 << 20, need)))

    kernel = functools.partial(_mlp_kernel, batch=batch, tile=tile,
                               n_tiles=n_tiles)
    out_row = pl.pallas_call(
        kernel,
        out_shape=jax.ShapeDtypeStruct((1, batch), jnp.float32),
        grid_spec=pltpu.PrefetchScalarGridSpec(
            num_scalar_prefetch=0,
            grid=(n_tiles,),
            in_specs=[
                # Streamed, naturally-laid-out input tiles (double-buffered).
                pl.BlockSpec((tile, IN_F), lambda i: (i, 0)),
                # Whole parameter slab, VMEM-resident across the grid.
                pl.BlockSpec((N_LAYERS, PAD_F, SLAB_COLS), lambda i: (0, 0, 0)),
            ],
            out_specs=pl.BlockSpec((1, batch), lambda i: (0, 0)),
            scratch_shapes=[
                pltpu.VMEM((n_tiles, PAD_F, tile), jnp.float32),  # resident h
                pltpu.VMEM((PAD_F, 1), jnp.float32),              # BN1 sum
                pltpu.VMEM((PAD_F, 1), jnp.float32),              # BN1 sum sq
            ],
        ),
        compiler_params=pltpu.CompilerParams(
            # BN statistics couple every tile (cross-tile accumulators plus a
            # serial finalize step), so the batch axis must stay "arbitrary".
            # TODO(synk): a v7x dual-TC "parallel" split needs a cross-core BN
            # stats exchange; not implemented here.
            dimension_semantics=("arbitrary",),
            vmem_limit_bytes=vmem_limit,
        ),
    )(x2d, pslab)
    return out_row.reshape(batch, 1)


def init_params(key):
    """Deterministic params mirroring the PyTorch module (W stored (out, in))."""
    params = []
    for li, (d_out, d_in) in enumerate(LAYER_DIMS):
        key, kw, kb = jax.random.split(key, 3)
        bound = 1.0 / (d_in ** 0.5)
        w = jax.random.uniform(kw, (d_out, d_in), jnp.float32, -bound, bound)
        b = jax.random.uniform(kb, (d_out,), jnp.float32, -bound, bound)
        params.extend([w, b])
        if li < 3:                        # BatchNorm1d follows the first 3 blocks
            params.extend([jnp.ones((d_out,), jnp.float32),
                           jnp.zeros((d_out,), jnp.float32)])
    return params


def reference_forward(x, params):
    """Pure-JAX reference matching the PyTorch forward (training-mode BN stats)."""
    (w1, b1, g1, be1, w2, b2, g2, be2, w3, b3, g3, be3, w4, b4) = params

    def bn(h, g, be):
        mu = jnp.mean(h, axis=0, keepdims=True)
        var = jnp.mean((h - mu) ** 2, axis=0, keepdims=True)
        return (h - mu) * jax.lax.rsqrt(var + EPS) * g + be

    h = x.reshape(x.shape[0], -1).astype(jnp.float32)
    h = jnp.maximum(h @ w1.T + b1, 0.0); h = bn(h, g1, be1)
    h = jnp.maximum(h @ w2.T + b2, 0.0); h = bn(h, g2, be2)
    h = jnp.maximum(h @ w3.T + b3, 0.0); h = bn(h, g3, be3)
    return jax.nn.sigmoid(h @ w4.T + b4)


if __name__ == "__main__":
    key = jax.random.PRNGKey(0)
    kparams, kx = jax.random.split(key)
    params = init_params(kparams)
    pslab = pack_params(params)            # one-time, host-side parameter packing

    fwd = jax.jit(network_sequential_forward)

    # Exercise both the multi-tile grid path (1024 = 2 x 512 lane-dense tiles)
    # and the single-tile path (128).  Flatten is a no-op on (B, 8) inputs.
    for batch in (1024, 128):
        x = jax.random.normal(jax.random.fold_in(kx, batch), (batch, IN_F),
                              dtype=jnp.float32)
        out = jax.block_until_ready(fwd(x, pslab))
        ref = reference_forward(x, params)
        assert out.shape == (batch, 1)
        assert jnp.allclose(out, ref, atol=1e-4, rtol=1e-4), (batch, out, ref)

    # TODO(synk): PyTorch training-mode BatchNorm1d also updates running_mean /
    # running_var (unbiased); only the forward activations are reproduced here.
    print("KERNEL_OK")
</pallas_src>

<mosaic_0001>
module attributes {stable_mosaic.version = 11 : i64} {
  func.func @_mlp_kernel(%arg0: i32, %arg1: memref<512x8xf32, #tpu.memory_space<vmem>>, %arg2: memref<4x16x32xf32, #tpu.memory_space<vmem>>, %arg3: memref<1x1024xf32, #tpu.memory_space<vmem>>, %arg4: memref<2x16x512xf32, #tpu.memory_space<vmem>>, %arg5: memref<16x1xf32, #tpu.memory_space<vmem>>, %arg6: memref<16x1xf32, #tpu.memory_space<vmem>>) attributes {dimension_semantics = [#tpu.dimension_semantics<arbitrary>], iteration_bounds = array<i64: 2>, scalar_prefetch = 0 : i64, scratch_operands = 3 : i64, tpu.core_type = #tpu.core_type<tc>, window_params = [{transform_indices = @transform_0, window_bounds = array<i64: 512, 8>}, {pipeline_mode = #tpu.pipeline_mode<synchronous>, transform_indices = @transform_1, window_bounds = array<i64: 4, 16, 32>}, {pipeline_mode = #tpu.pipeline_mode<synchronous>, transform_indices = @transform_2, window_bounds = array<i64: 1, 1024>}]} {
    %c0_i32 = arith.constant 0 : i32
    %0 = arith.cmpi eq, %arg0, %c0_i32 : i32
    %1 = arith.extui %0 : i1 to i32
    %c0_i32_0 = arith.constant 0 : i32
    %2 = arith.cmpi ne, %1, %c0_i32_0 : i32
    scf.if %2 {
      %cst_21 = arith.constant 0.000000e+00 : f32
      %31 = vector.broadcast %cst_21 : f32 to vector<16x1xf32>
      %c0_22 = arith.constant 0 : index
      %c0_23 = arith.constant 0 : index
      %32 = vector.load %arg5[%c0_22, %c0_23] : memref<16x1xf32, #tpu.memory_space<vmem>>, vector<16x1xf32>
      tpu.vector_store %arg5[%c0_22, %c0_23], %31 {strides = array<i32>} : memref<16x1xf32, #tpu.memory_space<vmem>>, vector<16x1xf32>,
      %cst_24 = arith.constant 0.000000e+00 : f32
      %33 = vector.broadcast %cst_24 : f32 to vector<16x1xf32>
      %c0_25 = arith.constant 0 : index
      %c0_26 = arith.constant 0 : index
      %34 = vector.load %arg6[%c0_25, %c0_26] : memref<16x1xf32, #tpu.memory_space<vmem>>, vector<16x1xf32>
      tpu.vector_store %arg6[%c0_25, %c0_26], %33 {strides = array<i32>} : memref<16x1xf32, #tpu.memory_space<vmem>>, vector<16x1xf32>,
    } else {
    }
    %c0 = arith.constant 0 : index
    %c0_1 = arith.constant 0 : index
    %c0_2 = arith.constant 0 : index
    %3 = vector.load %arg2[%c0, %c0_1, %c0_2] : memref<4x16x32xf32, #tpu.memory_space<vmem>>, vector<1x16x8xf32>
    %4 = vector.shape_cast %3 : vector<1x16x8xf32> to vector<16x8xf32>
    %c0_3 = arith.constant 0 : index
    %c0_4 = arith.constant 0 : index
    %c16 = arith.constant 16 : index
    %5 = vector.load %arg2[%c0_3, %c0_4, %c16] : memref<4x16x32xf32, #tpu.memory_space<vmem>>, vector<1x16x1xf32>
    %6 = vector.shape_cast %5 : vector<1x16x1xf32> to vector<16x1xf32>
    %c0_5 = arith.constant 0 : index
    %c0_6 = arith.constant 0 : index
    %7 = vector.load %arg1[%c0_5, %c0_6] : memref<512x8xf32, #tpu.memory_space<vmem>>, vector<512x8xf32>
    %cst = arith.constant dense<0.000000e+00> : vector<16x512xf32>
    %8 = tpu.matmul %4, %7, %cst {dimension_numbers = #tpu.dot_dimension_numbers<[1], [1], [0], [0], [0, 0, 1, 0], [], []>} : vector<16x8xf32>, vector<512x8xf32>, vector<16x512xf32> -> vector<16x512xf32>
    %9 = vector.broadcast %6 : vector<16x1xf32> to vector<16x512xf32>
    %10 = arith.addf %8, %9 : vector<16x512xf32>
    %cst_7 = arith.constant 0.000000e+00 : f32
    %11 = vector.broadcast %cst_7 : f32 to vector<16x512xf32>
    %12 = arith.maximumf %10, %11 : vector<16x512xf32>
    %13 = arith.index_cast %arg0 : i32 to index
    %c0_8 = arith.constant 0 : index
    %c0_9 = arith.constant 0 : index
    %14 = vector.load %arg4[%13, %c0_8, %c0_9] : memref<2x16x512xf32, #tpu.memory_space<vmem>>, vector<1x16x512xf32>
    %15 = vector.shape_cast %14 : vector<1x16x512xf32> to vector<16x512xf32>
    %16 = vector.shape_cast %12 : vector<16x512xf32> to vector<1x16x512xf32>
    tpu.vector_store %arg4[%13, %c0_8, %c0_9], %16 {strides = array<i32>} : memref<2x16x512xf32, #tpu.memory_space<vmem>>, vector<1x16x512xf32>,
    %c0_10 = arith.constant 0 : index
    %c0_11 = arith.constant 0 : index
    %17 = vector.load %arg5[%c0_10, %c0_11] : memref<16x1xf32, #tpu.memory_space<vmem>>, vector<16x1xf32>
    %cst_12 = arith.constant dense<0.000000e+00> : vector<16xf32>
    %18 = vector.multi_reduction <add>, %12, %cst_12 [1] : vector<16x512xf32> to vector<16xf32>
    %19 = vector.shape_cast %18 : vector<16xf32> to vector<16x1xf32>
    %20 = arith.addf %17, %19 : vector<16x1xf32>
    %c0_13 = arith.constant 0 : index
    %c0_14 = arith.constant 0 : index
    %21 = vector.load %arg5[%c0_13, %c0_14] : memref<16x1xf32, #tpu.memory_space<vmem>>, vector<16x1xf32>
    tpu.vector_store %arg5[%c0_13, %c0_14], %20 {strides = array<i32>} : memref<16x1xf32, #tpu.memory_space<vmem>>, vector<16x1xf32>,
    %c0_15 = arith.constant 0 : index
    %c0_16 = arith.constant 0 : index
    %22 = vector.load %arg6[%c0_15, %c0_16] : memref<16x1xf32, #tpu.memory_space<vmem>>, vector<16x1xf32>
    %23 = arith.mulf %12, %12 : vector<16x512xf32>
    %cst_17 = arith.constant dense<0.000000e+00> : vector<16xf32>
    %24 = vector.multi_reduction <add>, %23, %cst_17 [1] : vector<16x512xf32> to vector<16xf32>
    %25 = vector.shape_cast %24 : vector<16xf32> to vector<16x1xf32>
    %26 = arith.addf %22, %25 : vector<16x1xf32>
    %c0_18 = arith.constant 0 : index
    %c0_19 = arith.constant 0 : index
    %27 = vector.load %arg6[%c0_18, %c0_19] : memref<16x1xf32, #tpu.memory_space<vmem>>, vector<16x1xf32>
    tpu.vector_store %arg6[%c0_18, %c0_19], %26 {strides = array<i32>} : memref<16x1xf32, #tpu.memory_space<vmem>>, vector<16x1xf32>,
    %c1_i32 = arith.constant 1 : i32
    %28 = arith.cmpi eq, %arg0, %c1_i32 : i32
    %29 = arith.extui %28 : i1 to i32
    %c0_i32_20 = arith.constant 0 : i32
    %30 = arith.cmpi ne, %29, %c0_i32_20 : i32
    scf.if %30 {
      %c0_21 = arith.constant 0 : index
      %c0_22 = arith.constant 0 : index
      %31 = vector.load %arg5[%c0_21, %c0_22] : memref<16x1xf32, #tpu.memory_space<vmem>>, vector<16x1xf32>
      %c0_23 = arith.constant 0 : index
      %c0_24 = arith.constant 0 : index
      %32 = vector.load %arg6[%c0_23, %c0_24] : memref<16x1xf32, #tpu.memory_space<vmem>>, vector<16x1xf32>
      %c0_25 = arith.constant 0 : index
      %c0_26 = arith.constant 0 : index
      %c17 = arith.constant 17 : index
      %33 = vector.load %arg2[%c0_25, %c0_26, %c17] : memref<4x16x32xf32, #tpu.memory_space<vmem>>, vector<1x16x1xf32>
      %34 = vector.shape_cast %33 : vector<1x16x1xf32> to vector<16x1xf32>
      %c0_27 = arith.constant 0 : index
      %c0_28 = arith.constant 0 : index
      %c18 = arith.constant 18 : index
      %35 = vector.load %arg2[%c0_27, %c0_28, %c18] : memref<4x16x32xf32, #tpu.memory_space<vmem>>, vector<1x16x1xf32>
      %36 = vector.shape_cast %35 : vector<1x16x1xf32> to vector<16x1xf32>
      %cst_29 = arith.constant 9.765625E-4 : f32
      %37 = vector.broadcast %cst_29 : f32 to vector<16x1xf32>
      %38 = arith.mulf %31, %37 : vector<16x1xf32>
      %cst_30 = arith.constant 9.765625E-4 : f32
      %39 = vector.broadcast %cst_30 : f32 to vector<16x1xf32>
      %40 = arith.mulf %32, %39 : vector<16x1xf32>
      %41 = arith.mulf %38, %38 : vector<16x1xf32>
      %42 = arith.subf %40, %41 : vector<16x1xf32>
      %cst_31 = arith.constant 0.000000e+00 : f32
      %43 = vector.broadcast %cst_31 : f32 to vector<16x1xf32>
      %44 = arith.maximumf %42, %43 : vector<16x1xf32>
      %cst_32 = arith.constant 9.99999974E-6 : f32
      %45 = vector.broadcast %cst_32 : f32 to vector<16x1xf32>
      %46 = arith.addf %44, %45 : vector<16x1xf32>
      %47 = math.rsqrt %46 : vector<16x1xf32>
      %48 = arith.mulf %34, %47 : vector<16x1xf32>
      %49 = arith.mulf %38, %48 : vector<16x1xf32>
      %50 = arith.subf %36, %49 : vector<16x1xf32>
      %c1 = arith.constant 1 : index
      %c0_33 = arith.constant 0 : index
      %c0_34 = arith.constant 0 : index
      %51 = vector.load %arg2[%c1, %c0_33, %c0_34] : memref<4x16x32xf32, #tpu.memory_space<vmem>>, vector<1x16x32xf32>
      %52 = vector.shape_cast %51 : vector<1x16x32xf32> to vector<16x32xf32>
      %53 = vector.extract_strided_slice %52 {offsets = [0, 0], sizes = [16, 16], strides = [1, 1]} : vector<16x32xf32> to vector<16x16xf32>
      %54 = vector.extract_strided_slice %52 {offsets = [0, 16], sizes = [16, 1], strides = [1, 1]} : vector<16x32xf32> to vector<16x1xf32>
      %55 = vector.extract_strided_slice %52 {offsets = [0, 17], sizes = [16, 1], strides = [1, 1]} : vector<16x32xf32> to vector<16x1xf32>
      %56 = vector.extract_strided_slice %52 {offsets = [0, 18], sizes = [16, 1], strides = [1, 1]} : vector<16x32xf32> to vector<16x1xf32>
      %cst_35 = arith.constant 0.000000e+00 : f32
      %57 = vector.broadcast %cst_35 : f32 to vector<16x1xf32>
      %cst_36 = arith.constant 0.000000e+00 : f32
      %58 = vector.broadcast %cst_36 : f32 to vector<16x1xf32>
      %c0_37 = arith.constant 0 : index
      %c0_38 = arith.constant 0 : index
      %c0_39 = arith.constant 0 : index
      %59 = vector.load %arg4[%c0_37, %c0_38, %c0_39] : memref<2x16x512xf32, #tpu.memory_space<vmem>>, vector<1x16x512xf32>
      %60 = vector.shape_cast %59 : vector<1x16x512xf32> to vector<16x512xf32>
      %61 = vector.broadcast %48 : vector<16x1xf32> to vector<16x512xf32>
      %62 = arith.mulf %60, %61 : vector<16x512xf32>
      %63 = vector.broadcast %50 : vector<16x1xf32> to vector<16x512xf32>
      %64 = arith.addf %62, %63 : vector<16x512xf32>
      %cst_40 = arith.constant dense<0.000000e+00> : vector<16x512xf32>
      %65 = tpu.matmul %53, %64, %cst_40 {dimension_numbers = #tpu.dot_dimension_numbers<[1], [0], [0], [1], [0, 0, 1, 1], [], []>} : vector<16x16xf32>, vector<16x512xf32>, vector<16x512xf32> -> vector<16x512xf32>
      %66 = vector.broadcast %54 : vector<16x1xf32> to vector<16x512xf32>
      %67 = arith.addf %65, %66 : vector<16x512xf32>
      %cst_41 = arith.constant 0.000000e+00 : f32
      %68 = vector.broadcast %cst_41 : f32 to vector<16x512xf32>
      %69 = arith.maximumf %67, %68 : vector<16x512xf32>
      %c0_42 = arith.constant 0 : index
      %c0_43 = arith.constant 0 : index
      %c0_44 = arith.constant 0 : index
      %70 = vector.load %arg4[%c0_42, %c0_43, %c0_44] : memref<2x16x512xf32, #tpu.memory_space<vmem>>, vector<1x16x512xf32>
      %71 = vector.shape_cast %70 : vector<1x16x512xf32> to vector<16x512xf32>
      %72 = vector.shape_cast %69 : vector<16x512xf32> to vector<1x16x512xf32>
      tpu.vector_store %arg4[%c0_42, %c0_43, %c0_44], %72 {strides = array<i32>} : memref<2x16x512xf32, #tpu.memory_space<vmem>>, vector<1x16x512xf32>,
      %cst_45 = arith.constant dense<0.000000e+00> : vector<16xf32>
      %73 = vector.multi_reduction <add>, %69, %cst_45 [1] : vector<16x512xf32> to vector<16xf32>
      %74 = vector.shape_cast %73 : vector<16xf32> to vector<16x1xf32>
      %75 = arith.addf %57, %74 : vector<16x1xf32>
      %76 = arith.mulf %69, %69 : vector<16x512xf32>
      %cst_46 = arith.constant dense<0.000000e+00> : vector<16xf32>
      %77 = vector.multi_reduction <add>, %76, %cst_46 [1] : vector<16x512xf32> to vector<16xf32>
      %78 = vector.shape_cast %77 : vector<16xf32> to vector<16x1xf32>
      %79 = arith.addf %58, %78 : vector<16x1xf32>
      %c1_47 = arith.constant 1 : index
      %c0_48 = arith.constant 0 : index
      %c0_49 = arith.constant 0 : index
      %80 = vector.load %arg4[%c1_47, %c0_48, %c0_49] : memref<2x16x512xf32, #tpu.memory_space<vmem>>, vector<1x16x512xf32>
      %81 = vector.shape_cast %80 : vector<1x16x512xf32> to vector<16x512xf32>
      %82 = vector.broadcast %48 : vector<16x1xf32> to vector<16x512xf32>
      %83 = arith.mulf %81, %82 : vector<16x512xf32>
      %84 = vector.broadcast %50 : vector<16x1xf32> to vector<16x512xf32>
      %85 = arith.addf %83, %84 : vector<16x512xf32>
      %cst_50 = arith.constant dense<0.000000e+00> : vector<16x512xf32>
      %86 = tpu.matmul %53, %85, %cst_50 {dimension_numbers = #tpu.dot_dimension_numbers<[1], [0], [0], [1], [0, 0, 1, 1], [], []>} : vector<16x16xf32>, vector<16x512xf32>, vector<16x512xf32> -> vector<16x512xf32>
      %87 = vector.broadcast %54 : vector<16x1xf32> to vector<16x512xf32>
      %88 = arith.addf %86, %87 : vector<16x512xf32>
      %cst_51 = arith.constant 0.000000e+00 : f32
      %89 = vector.broadcast %cst_51 : f32 to vector<16x512xf32>
      %90 = arith.maximumf %88, %89 : vector<16x512xf32>
      %c1_52 = arith.constant 1 : index
      %c0_53 = arith.constant 0 : index
      %c0_54 = arith.constant 0 : index
      %91 = vector.load %arg4[%c1_52, %c0_53, %c0_54] : memref<2x16x512xf32, #tpu.memory_space<vmem>>, vector<1x16x512xf32>
      %92 = vector.shape_cast %91 : vector<1x16x512xf32> to vector<16x512xf32>
      %93 = vector.shape_cast %90 : vector<16x512xf32> to vector<1x16x512xf32>
      tpu.vector_store %arg4[%c1_52, %c0_53, %c0_54], %93 {strides = array<i32>} : memref<2x16x512xf32, #tpu.memory_space<vmem>>, vector<1x16x512xf32>,
      %cst_55 = arith.constant dense<0.000000e+00> : vector<16xf32>
      %94 = vector.multi_reduction <add>, %90, %cst_55 [1] : vector<16x512xf32> to vector<16xf32>
      %95 = vector.shape_cast %94 : vector<16xf32> to vector<16x1xf32>
      %96 = arith.addf %75, %95 : vector<16x1xf32>
      %97 = arith.mulf %90, %90 : vector<16x512xf32>
      %cst_56 = arith.constant dense<0.000000e+00> : vector<16xf32>
      %98 = vector.multi_reduction <add>, %97, %cst_56 [1] : vector<16x512xf32> to vector<16xf32>
      %99 = vector.shape_cast %98 : vector<16xf32> to vector<16x1xf32>
      %100 = arith.addf %79, %99 : vector<16x1xf32>
      %cst_57 = arith.constant 9.765625E-4 : f32
      %101 = vector.broadcast %cst_57 : f32 to vector<16x1xf32>
      %102 = arith.mulf %96, %101 : vector<16x1xf32>
      %cst_58 = arith.constant 9.765625E-4 : f32
      %103 = vector.broadcast %cst_58 : f32 to vector<16x1xf32>
      %104 = arith.mulf %100, %103 : vector<16x1xf32>
      %105 = arith.mulf %102, %102 : vector<16x1xf32>
      %106 = arith.subf %104, %105 : vector<16x1xf32>
      %cst_59 = arith.constant 0.000000e+00 : f32
      %107 = vector.broadcast %cst_59 : f32 to vector<16x1xf32>
      %108 = arith.maximumf %106, %107 : vector<16x1xf32>
      %cst_60 = arith.constant 9.99999974E-6 : f32
      %109 = vector.broadcast %cst_60 : f32 to vector<16x1xf32>
      %110 = arith.addf %108, %109 : vector<16x1xf32>
      %111 = math.rsqrt %110 : vector<16x1xf32>
      %112 = arith.mulf %55, %111 : vector<16x1xf32>
      %113 = arith.mulf %102, %112 : vector<16x1xf32>
      %114 = arith.subf %56, %113 : vector<16x1xf32>
      %c2 = arith.constant 2 : index
      %c0_61 = arith.constant 0 : index
      %c0_62 = arith.constant 0 : index
      %115 = vector.load %arg2[%c2, %c0_61, %c0_62] : memref<4x16x32xf32, #tpu.memory_space<vmem>>, vector<1x16x32xf32>
      %116 = vector.shape_cast %115 : vector<1x16x32xf32> to vector<16x32xf32>
      %117 = vector.extract_strided_slice %116 {offsets = [0, 0], sizes = [16, 16], strides = [1, 1]} : vector<16x32xf32> to vector<16x16xf32>
      %118 = vector.extract_strided_slice %116 {offsets = [0, 16], sizes = [16, 1], strides = [1, 1]} : vector<16x32xf32> to vector<16x1xf32>
      %119 = vector.extract_strided_slice %116 {offsets = [0, 17], sizes = [16, 1], strides = [1, 1]} : vector<16x32xf32> to vector<16x1xf32>
      %120 = vector.extract_strided_slice %116 {offsets = [0, 18], sizes = [16, 1], strides = [1, 1]} : vector<16x32xf32> to vector<16x1xf32>
      %cst_63 = arith.constant 0.000000e+00 : f32
      %121 = vector.broadcast %cst_63 : f32 to vector<16x1xf32>
      %cst_64 = arith.constant 0.000000e+00 : f32
      %122 = vector.broadcast %cst_64 : f32 to vector<16x1xf32>
      %c0_65 = arith.constant 0 : index
      %c0_66 = arith.constant 0 : index
      %c0_67 = arith.constant 0 : index
      %123 = vector.load %arg4[%c0_65, %c0_66, %c0_67] : memref<2x16x512xf32, #tpu.memory_space<vmem>>, vector<1x16x512xf32>
      %124 = vector.shape_cast %123 : vector<1x16x512xf32> to vector<16x512xf32>
      %125 = vector.broadcast %112 : vector<16x1xf32> to vector<16x512xf32>
      %126 = arith.mulf %124, %125 : vector<16x512xf32>
      %127 = vector.broadcast %114 : vector<16x1xf32> to vector<16x512xf32>
      %128 = arith.addf %126, %127 : vector<16x512xf32>
      %cst_68 = arith.constant dense<0.000000e+00> : vector<16x512xf32>
      %129 = tpu.matmul %117, %128, %cst_68 {dimension_numbers = #tpu.dot_dimension_numbers<[1], [0], [0], [1], [0, 0, 1, 1], [], []>} : vector<16x16xf32>, vector<16x512xf32>, vector<16x512xf32> -> vector<16x512xf32>
      %130 = vector.broadcast %118 : vector<16x1xf32> to vector<16x512xf32>
      %131 = arith.addf %129, %130 : vector<16x512xf32>
      %cst_69 = arith.constant 0.000000e+00 : f32
      %132 = vector.broadcast %cst_69 : f32 to vector<16x512xf32>
      %133 = arith.maximumf %131, %132 : vector<16x512xf32>
      %c0_70 = arith.constant 0 : index
      %c0_71 = arith.constant 0 : index
      %c0_72 = arith.constant 0 : index
      %134 = vector.load %arg4[%c0_70, %c0_71, %c0_72] : memref<2x16x512xf32, #tpu.memory_space<vmem>>, vector<1x16x512xf32>
      %135 = vector.shape_cast %134 : vector<1x16x512xf32> to vector<16x512xf32>
      %136 = vector.shape_cast %133 : vector<16x512xf32> to vector<1x16x512xf32>
      tpu.vector_store %arg4[%c0_70, %c0_71, %c0_72], %136 {strides = array<i32>} : memref<2x16x512xf32, #tpu.memory_space<vmem>>, vector<1x16x512xf32>,
      %cst_73 = arith.constant dense<0.000000e+00> : vector<16xf32>
      %137 = vector.multi_reduction <add>, %133, %cst_73 [1] : vector<16x512xf32> to vector<16xf32>
      %138 = vector.shape_cast %137 : vector<16xf32> to vector<16x1xf32>
      %139 = arith.addf %121, %138 : vector<16x1xf32>
      %140 = arith.mulf %133, %133 : vector<16x512xf32>
      %cst_74 = arith.constant dense<0.000000e+00> : vector<16xf32>
      %141 = vector.multi_reduction <add>, %140, %cst_74 [1] : vector<16x512xf32> to vector<16xf32>
      %142 = vector.shape_cast %141 : vector<16xf32> to vector<16x1xf32>
      %143 = arith.addf %122, %142 : vector<16x1xf32>
      %c1_75 = arith.constant 1 : index
      %c0_76 = arith.constant 0 : index
      %c0_77 = arith.constant 0 : index
      %144 = vector.load %arg4[%c1_75, %c0_76, %c0_77] : memref<2x16x512xf32, #tpu.memory_space<vmem>>, vector<1x16x512xf32>
      %145 = vector.shape_cast %144 : vector<1x16x512xf32> to vector<16x512xf32>
      %146 = vector.broadcast %112 : vector<16x1xf32> to vector<16x512xf32>
      %147 = arith.mulf %145, %146 : vector<16x512xf32>
      %148 = vector.broadcast %114 : vector<16x1xf32> to vector<16x512xf32>
      %149 = arith.addf %147, %148 : vector<16x512xf32>
      %cst_78 = arith.constant dense<0.000000e+00> : vector<16x512xf32>
      %150 = tpu.matmul %117, %149, %cst_78 {dimension_numbers = #tpu.dot_dimension_numbers<[1], [0], [0], [1], [0, 0, 1, 1], [], []>} : vector<16x16xf32>, vector<16x512xf32>, vector<16x512xf32> -> vector<16x512xf32>
      %151 = vector.broadcast %118 : vector<16x1xf32> to vector<16x512xf32>
      %152 = arith.addf %150, %151 : vector<16x512xf32>
      %cst_79 = arith.constant 0.000000e+00 : f32
      %153 = vector.broadcast %cst_79 : f32 to vector<16x512xf32>
      %154 = arith.maximumf %152, %153 : vector<16x512xf32>
      %c1_80 = arith.constant 1 : index
      %c0_81 = arith.constant 0 : index
      %c0_82 = arith.constant 0 : index
      %155 = vector.load %arg4[%c1_80, %c0_81, %c0_82] : memref<2x16x512xf32, #tpu.memory_space<vmem>>, vector<1x16x512xf32>
      %156 = vector.shape_cast %155 : vector<1x16x512xf32> to vector<16x512xf32>
      %157 = vector.shape_cast %154 : vector<16x512xf32> to vector<1x16x512xf32>
      tpu.vector_store %arg4[%c1_80, %c0_81, %c0_82], %157 {strides = array<i32>} : memref<2x16x512xf32, #tpu.memory_space<vmem>>, vector<1x16x512xf32>,
      %cst_83 = arith.constant dense<0.000000e+00> : vector<16xf32>
      %158 = vector.multi_reduction <add>, %154, %cst_83 [1] : vector<16x512xf32> to vector<16xf32>
      %159 = vector.shape_cast %158 : vector<16xf32> to vector<16x1xf32>
      %160 = arith.addf %139, %159 : vector<16x1xf32>
      %161 = arith.mulf %154, %154 : vector<16x512xf32>
      %cst_84 = arith.constant dense<0.000000e+00> : vector<16xf32>
      %162 = vector.multi_reduction <add>, %161, %cst_84 [1] : vector<16x512xf32> to vector<16xf32>
      %163 = vector.shape_cast %162 : vector<16xf32> to vector<16x1xf32>
      %164 = arith.addf %143, %163 : vector<16x1xf32>
      %cst_85 = arith.constant 9.765625E-4 : f32
      %165 = vector.broadcast %cst_85 : f32 to vector<16x1xf32>
      %166 = arith.mulf %160, %165 : vector<16x1xf32>
      %cst_86 = arith.constant 9.765625E-4 : f32
      %167 = vector.broadcast %cst_86 : f32 to vector<16x1xf32>
      %168 = arith.mulf %164, %167 : vector<16x1xf32>
      %169 = arith.mulf %166, %166 : vector<16x1xf32>
      %170 = arith.subf %168, %169 : vector<16x1xf32>
      %cst_87 = arith.constant 0.000000e+00 : f32
      %171 = vector.broadcast %cst_87 : f32 to vector<16x1xf32>
      %172 = arith.maximumf %170, %171 : vector<16x1xf32>
      %cst_88 = arith.constant 9.99999974E-6 : f32
      %173 = vector.broadcast %cst_88 : f32 to vector<16x1xf32>
      %174 = arith.addf %172, %173 : vector<16x1xf32>
      %175 = math.rsqrt %174 : vector<16x1xf32>
      %176 = arith.mulf %119, %175 : vector<16x1xf32>
      %177 = arith.mulf %166, %176 : vector<16x1xf32>
      %178 = arith.subf %120, %177 : vector<16x1xf32>
      %c3 = arith.constant 3 : index
      %c0_89 = arith.constant 0 : index
      %c0_90 = arith.constant 0 : index
      %179 = vector.load %arg2[%c3, %c0_89, %c0_90] : memref<4x16x32xf32, #tpu.memory_space<vmem>>, vector<1x16x32xf32>
      %180 = vector.shape_cast %179 : vector<1x16x32xf32> to vector<16x32xf32>
      %181 = vector.extract_strided_slice %180 {offsets = [0, 0], sizes = [16, 16], strides = [1, 1]} : vector<16x32xf32> to vector<16x16xf32>
      %182 = vector.extract_strided_slice %180 {offsets = [0, 16], sizes = [16, 1], strides = [1, 1]} : vector<16x32xf32> to vector<16x1xf32>
      %c0_91 = arith.constant 0 : index
      %c0_92 = arith.constant 0 : index
      %c0_93 = arith.constant 0 : index
      %183 = vector.load %arg4[%c0_91, %c0_92, %c0_93] : memref<2x16x512xf32, #tpu.memory_space<vmem>>, vector<1x16x512xf32>
      %184 = vector.shape_cast %183 : vector<1x16x512xf32> to vector<16x512xf32>
      %185 = vector.broadcast %176 : vector<16x1xf32> to vector<16x512xf32>
      %186 = arith.mulf %184, %185 : vector<16x512xf32>
      %187 = vector.broadcast %178 : vector<16x1xf32> to vector<16x512xf32>
      %188 = arith.addf %186, %187 : vector<16x512xf32>
      %cst_94 = arith.constant dense<0.000000e+00> : vector<16x512xf32>
      %189 = tpu.matmul %181, %188, %cst_94 {dimension_numbers = #tpu.dot_dimension_numbers<[1], [0], [0], [1], [0, 0, 1, 1], [], []>} : vector<16x16xf32>, vector<16x512xf32>, vector<16x512xf32> -> vector<16x512xf32>
      %190 = vector.broadcast %182 : vector<16x1xf32> to vector<16x512xf32>
      %191 = arith.addf %189, %190 : vector<16x512xf32>
      %192 = vector.extract_strided_slice %191 {offsets = [0, 0], sizes = [1, 512], strides = [1, 1]} : vector<16x512xf32> to vector<1x512xf32>
      %193 = arith.negf %192 : vector<1x512xf32>
      %194 = math.exp %193 : vector<1x512xf32>
      %cst_95 = arith.constant 1.000000e+00 : f32
      %195 = vector.broadcast %cst_95 : f32 to vector<1x512xf32>
      %196 = arith.addf %195, %194 : vector<1x512xf32>
      %197 = arith.divf %195, %196 : vector<1x512xf32>
      %c0_96 = arith.constant 0 : index
      %c0_97 = arith.constant 0 : index
      %198 = vector.load %arg3[%c0_96, %c0_97] : memref<1x1024xf32, #tpu.memory_space<vmem>>, vector<1x512xf32>
      tpu.vector_store %arg3[%c0_96, %c0_97], %197 {strides = array<i32>} : memref<1x1024xf32, #tpu.memory_space<vmem>>, vector<1x512xf32>,
      %c1_98 = arith.constant 1 : index
      %c0_99 = arith.constant 0 : index
      %c0_100 = arith.constant 0 : index
      %199 = vector.load %arg4[%c1_98, %c0_99, %c0_100] : memref<2x16x512xf32, #tpu.memory_space<vmem>>, vector<1x16x512xf32>
      %200 = vector.shape_cast %199 : vector<1x16x512xf32> to vector<16x512xf32>
      %201 = vector.broadcast %176 : vector<16x1xf32> to vector<16x512xf32>
      %202 = arith.mulf %200, %201 : vector<16x512xf32>
      %203 = vector.broadcast %178 : vector<16x1xf32> to vector<16x512xf32>
      %204 = arith.addf %202, %203 : vector<16x512xf32>
      %cst_101 = arith.constant dense<0.000000e+00> : vector<16x512xf32>
      %205 = tpu.matmul %181, %204, %cst_101 {dimension_numbers = #tpu.dot_dimension_numbers<[1], [0], [0], [1], [0, 0, 1, 1], [], []>} : vector<16x16xf32>, vector<16x512xf32>, vector<16x512xf32> -> vector<16x512xf32>
      %206 = vector.broadcast %182 : vector<16x1xf32> to vector<16x512xf32>
      %207 = arith.addf %205, %206 : vector<16x512xf32>
      %208 = vector.extract_strided_slice %207 {offsets = [0, 0], sizes = [1, 512], strides = [1, 1]} : vector<16x512xf32> to vector<1x512xf32>
      %209 = arith.negf %208 : vector<1x512xf32>
      %210 = math.exp %209 : vector<1x512xf32>
      %cst_102 = arith.constant 1.000000e+00 : f32
      %211 = vector.broadcast %cst_102 : f32 to vector<1x512xf32>
      %212 = arith.addf %211, %210 : vector<1x512xf32>
      %213 = arith.divf %211, %212 : vector<1x512xf32>
      %c0_103 = arith.constant 0 : index
      %c512 = arith.constant 512 : index
      %214 = vector.load %arg3[%c0_103, %c512] : memref<1x1024xf32, #tpu.memory_space<vmem>>, vector<1x512xf32>
      tpu.vector_store %arg3[%c0_103, %c512], %213 {strides = array<i32>} : memref<1x1024xf32, #tpu.memory_space<vmem>>, vector<1x512xf32>,
    } else {
    }
    return
  }
  func.func @transform_0(%arg0: i32) -> (i32, i32) {
    %c0_i32 = arith.constant 0 : i32
    %c0_i32_0 = arith.constant 0 : i32
    return %arg0, %c0_i32 : i32, i32
  }
  func.func @transform_1(%arg0: i32) -> (i32, i32, i32) {
    %c0_i32 = arith.constant 0 : i32
    %c0_i32_0 = arith.constant 0 : i32
    %c0_i32_1 = arith.constant 0 : i32
    %c0_i32_2 = arith.constant 0 : i32
    return %c0_i32, %c0_i32_0, %c0_i32_1 : i32, i32, i32
  }
  func.func @transform_2(%arg0: i32) -> (i32, i32) {
    %c0_i32 = arith.constant 0 : i32
    %c0_i32_0 = arith.constant 0 : i32
    %c0_i32_1 = arith.constant 0 : i32
    return %c0_i32, %c0_i32_0 : i32, i32
  }
}

</mosaic_0001>

<llo_original>
// kernel: network_sequential_forward.1
$region0: #{network_sequential_forward.1}
  #allocation0 [shape = 'u32[]', space=smem, size = 0x4, offset = 0x4, fixed_abs, tag = 'smem constant byte address 0x4 - core index']
  #allocation1 [shape = 'u32[144,128]{1,0:T(1,128)}', space=vmem, size = 0x12000, scoped, tag = 'internal scratch']
  #allocation2 [shape = 'f32[2,16,512]{2,1,0:T(8,128)}', space=vmem, size = 0x10000, scoped, tag = 'scratch operand']
  #allocation3 [shape = 'f32[16,1]{1,0:T(8,128)}', space=vmem, size = 0x2000, scoped, tag = 'scratch operand']
  #allocation4 [shape = 'f32[16,1]{1,0:T(8,128)}', space=vmem, size = 0x2000, scoped, tag = 'scratch operand']
  %s0 = inlined_call_operand.vmem [shape: f32[1024,8], index: 0, kind: input, shape index: {}]
  %s1 = inlined_call_operand.vmem [shape: f32[4,16,32], index: 1, kind: input, shape index: {}]
  %s2 = inlined_call_operand.hbm [shape: f32[1,1024], index: 2, kind: output, shape index: {}]
  %s3 = sld [smem:[#allocation0]]
  $region49: #{network_sequential_forward.1} parent=0
    _
  %s5 = ssub.s32 1, %s3
  %s6 = scalar_select 0, %s5, %s3
  $region1: #{network_sequential_forward.1} parent=0
    #allocation5 [shape = 'u8[4096]{0}', space=vmem, size = 0x1000, scoped, tag = 'output window, operand 0, single buffered']
    #allocation6 [shape = 's32[2]{0}', space=sflag, size = 0x8, scoped, tag = 'scoped memory for network_sequential_forward.1']
    %7 = vsyncpa [#allocation6], 0
    loop: start=0, step=1, limit=4
    $region2: #{network_sequential_forward.1} parent=1 // loop_pre_header
      _
    $region3: #{network_sequential_forward.1} parent=1 // loop_header
      %s9 = sphi 0, %s13
      %p10 = scmp.ge.s32.totalorder %s9, 4
      %s19 = sphi 0, %s21
      %s22 = sphi 0, %s19
      %s23 = sphi 0, %s22
      %s39 = sphi 0, %s23
      %s43 = sphi 0, %s43
      %s45 = sphi 0, %s43
      %s46 = sphi 0, %s45
      %s60 = sphi 0, %s46
      %s64 = sphi 0, %s64
      %s66 = sphi 0, %s64
      %s67 = sphi 0, %s66
      %s81 = sphi 0, %s67
    $region4: #{network_sequential_forward.1} parent=1 // loop_header_branch
      %12 = sbr.rel (%p10) target = $region8
    $region5: #{network_sequential_forward.1} parent=1 // loop_body
      %s14 = ssub.s32 %s9, 1
      %s15 = ssub.s32 %s9, 2
      %s16 = sadd.s32 %s9, 1
      %s17 = ssub.s32 %s9, %s16
      %p18 = scmp.eq.s32.totalorder %s17, 0
      %s20 = sadd.s32 %s19, 1
      %s21 = scalar_select %p18, %s19, %s20
      %p24 = pneg %p18
      %p25 = scmp.eq.s32.totalorder %s9, 1
      %p26 = por %p24, %p25
      %p27 = scmp.ne.s32.totalorder %s19, %s22
      %p28 = scmp.eq.s32.totalorder %s9, 0
      %p29 = por %p27, %p28
      %p30 = scmp.ne.s32.totalorder %s19, %s22
      %p31 = scmp.eq.s32.totalorder %s14, 1
      %p32 = por %p30, %p31
      %p33 = scmp.ne.s32.totalorder %s22, %s23
      %p34 = scmp.eq.s32.totalorder %s14, 0
      %p35 = por %p33, %p34
      %p36 = scmp.ne.s32.totalorder %s22, %s23
      %p37 = scmp.eq.s32.totalorder %s15, 1
      %p38 = por %p36, %p37
      %p40 = scmp.ne.s32.totalorder %s23, %s39
      %p41 = scmp.eq.s32.totalorder %s15, 0
      %p42 = por %p40, %p41
      %s44 = sadd.s32 %s43, 1
      %p47 = scmp.eq.s32.totalorder %s9, 1
      %p48 = scmp.ne.s32.totalorder %s43, %s45
      %p49 = scmp.eq.s32.totalorder %s9, 0
      %p50 = por %p48, %p49
      %p51 = scmp.ne.s32.totalorder %s43, %s45
      %p52 = scmp.eq.s32.totalorder %s14, 1
      %p53 = por %p51, %p52
      %p54 = scmp.ne.s32.totalorder %s45, %s46
      %p55 = scmp.eq.s32.totalorder %s14, 0
      %p56 = por %p54, %p55
      %p57 = scmp.ne.s32.totalorder %s45, %s46
      %p58 = scmp.eq.s32.totalorder %s15, 1
      %p59 = por %p57, %p58
      %p61 = scmp.ne.s32.totalorder %s46, %s60
      %p62 = scmp.eq.s32.totalorder %s15, 0
      %p63 = por %p61, %p62
      %s65 = sadd.s32 %s64, 1
      %p68 = scmp.eq.s32.totalorder %s9, 1
      %p69 = scmp.ne.s32.totalorder %s64, %s66
      %p70 = scmp.eq.s32.totalorder %s9, 0
      %p71 = por %p69, %p70
      %p72 = scmp.ne.s32.totalorder %s64, %s66
      %p73 = scmp.eq.s32.totalorder %s14, 1
      %p74 = por %p72, %p73
      %p75 = scmp.ne.s32.totalorder %s66, %s67
      %p76 = scmp.eq.s32.totalorder %s14, 0
      %p77 = por %p75, %p76
      %p78 = scmp.ne.s32.totalorder %s66, %s67
      %p79 = scmp.eq.s32.totalorder %s15, 1
      %p80 = por %p78, %p79
      %p82 = scmp.ne.s32.totalorder %s67, %s81
      %p83 = scmp.eq.s32.totalorder %s15, 0
      %p84 = por %p82, %p83
      %p85 = scmp.le.s32.totalorder 1, %s9
      %p86 = scmp.lt.s32.totalorder %s9, 3
      %p87 = pnand %p85, %p86
      %p88 = pneg %p87
      // Predicated region
      $region9: #{network_sequential_forward.1} parent=5 // pred_check
        _
      $region10: #{network_sequential_forward.1} parent=5 // pred_check_branch
        %90 = sbr.rel (%p87) target = $region12
      $region11: #{network_sequential_forward.1} parent=5 // pred_region
        %s91 = ssub.s32 %s9, 1
        // Predicated region
        $region13: #{network_sequential_forward.1} parent=11 // pred_check
          %p92 = pneg %p56
        $region14: #{network_sequential_forward.1} parent=11 // pred_check_branch
          %94 = sbr.rel (%p92) target = $region16
        $region15: #{network_sequential_forward.1} parent=11 // pred_region
          _
        $region16: #{network_sequential_forward.1} parent=11 // pred_fallthru
          _
      $region12: #{network_sequential_forward.1} parent=5 // pred_fallthru
        _
      %p95 = scmp.lt.s32.totalorder %s9, 2
      // Predicated region
      $region17: #{network_sequential_forward.1} parent=5 // pred_check
        %p96 = pneg %p95
      $region18: #{network_sequential_forward.1} parent=5 // pred_check_branch
        %98 = sbr.rel (%p96) target = $region20
      $region19: #{network_sequential_forward.1} parent=5 // pred_region
        // Predicated region
        $region21: #{network_sequential_forward.1} parent=19 // pred_check
          %p99 = pneg %p29
        $region22: #{network_sequential_forward.1} parent=19 // pred_check_branch
          %101 = sbr.rel (%p99) target = $region24
        $region23: #{network_sequential_forward.1} parent=19 // pred_region
          %s102 = smul.u32 64, %s9
          %p103 = scmp.lt.s32.totalorder %s102, 127
          %s104 = scalar_select %p103, %s102, 127
          %s105 = smul.addr %s104, 8
          %s106 = scalar_lea.vmem %s0, %s105
          %s107 = smul.u32 64, %s9
        $region24: #{network_sequential_forward.1} parent=19 // pred_fallthru
          _
      $region20: #{network_sequential_forward.1} parent=5 // pred_fallthru
        _
      %p108 = scmp.le.s32.totalorder 1, %s9
      %p109 = scmp.lt.s32.totalorder %s9, 3
      %p110 = pnand %p108, %p109
      %p111 = pneg %p110
      // Predicated region
      $region25: #{network_sequential_forward.1} parent=5 // pred_check
        _
      $region26: #{network_sequential_forward.1} parent=5 // pred_check_branch
        %113 = sbr.rel (%p110) target = $region28
      $region27: #{network_sequential_forward.1} parent=5 // pred_region
        %s114 = ssub.s32 %s9, 1
        %s115 = smul.u32 64, %s14
        %p116 = scmp.lt.s32.totalorder %s115, 127
        %s117 = scalar_select %p116, %s115, 127
        %s118 = smul.addr %s117, 8
        %s119 = scalar_lea.vmem %s0, %s118
        %p120 = pneg %p35
        %p121 = pneg %p32
        %p122 = pneg %p56
        %p123 = pneg %p53
        %p124 = pneg %p77
        %p125 = pneg %p74
        %s126 = smul.u32 64, %s14
        %p127 = scmp.lt.s32.totalorder %s126, 127
        %s128 = scalar_select %p127, %s126, 127
        %s129 = smul.addr %s128, 8
        %s130 = scalar_lea.vmem %s0, %s129
        %s131 = smul.u32 64, %s14
        %p132 = scmp.eq.s32.totalorder %s14, 0
        // Predicated region
        $region29: #{network_sequential_forward.1} parent=27 // pred_check
          %p133 = pneg %p132
        $region30: #{network_sequential_forward.1} parent=27 // pred_check_branch
          %135 = sbr.rel (%p133) target = $region32
        $region31: #{network_sequential_forward.1} parent=27 // pred_region
          %vm136 = vcmask 7168
          %137 = vst.msk [vmem:[#allocation3] sm:$0xff] %vm136, 0.0
          %138 = vst.msk [vmem:[#allocation3 + $0x8] sm:$0xff] %vm136, 0.0
          %139 = vst.msk [vmem:[#allocation4] sm:$0xff] %vm136, 0.0
          %140 = vst.msk [vmem:[#allocation4 + $0x8] sm:$0xff] %vm136, 0.0
        $region32: #{network_sequential_forward.1} parent=27 // pred_fallthru
          _
        %v141 = vld [vmem:[%s1] sm:$0xff]
        %v142 = vld [vmem:[%s1 + $0x8] sm:$0xff]
        %v143 = vld [vmem:[%s130] sm:$0xff]
        %v144 = vld [vmem:[%s130 + $0x8] sm:$0xff]
        %v145 = vld [vmem:[%s130 + $0x10] sm:$0xff]
        %v146 = vld [vmem:[%s130 + $0x18] sm:$0xff]
        %v147 = vld [vmem:[%s130 + $0x20] sm:$0xff]
        %v148 = vld [vmem:[%s130 + $0x28] sm:$0xff]
        %v149 = vld [vmem:[%s130 + $0x30] sm:$0xff]
        %v150 = vld [vmem:[%s130 + $0x38] sm:$0xff]
        %v151 = vld [vmem:[%s130 + $0x40] sm:$0xff]
        %v152 = vld [vmem:[%s130 + $0x48] sm:$0xff]
        %v153 = vld [vmem:[%s130 + $0x50] sm:$0xff]
        %v154 = vld [vmem:[%s130 + $0x58] sm:$0xff]
        %v155 = vld [vmem:[%s130 + $0x60] sm:$0xff]
        %v156 = vld [vmem:[%s130 + $0x68] sm:$0xff]
        %v157 = vld [vmem:[%s130 + $0x70] sm:$0xff]
        %v158 = vld [vmem:[%s130 + $0x78] sm:$0xff]
        %v159 = vld [vmem:[%s130 + $0x80] sm:$0xff]
        %v160 = vld [vmem:[%s130 + $0x88] sm:$0xff]
        %v161 = vld [vmem:[%s130 + $0x90] sm:$0xff]
        %v162 = vld [vmem:[%s130 + $0x98] sm:$0xff]
        %v163 = vld [vmem:[%s130 + $0xa0] sm:$0xff]
        %v164 = vld [vmem:[%s130 + $0xa8] sm:$0xff]
        %v165 = vld [vmem:[%s130 + $0xb0] sm:$0xff]
        %v166 = vld [vmem:[%s130 + $0xb8] sm:$0xff]
        %v167 = vld [vmem:[%s130 + $0xc0] sm:$0xff]
        %v168 = vld [vmem:[%s130 + $0xc8] sm:$0xff]
        %v169 = vld [vmem:[%s130 + $0xd0] sm:$0xff]
        %v170 = vld [vmem:[%s130 + $0xd8] sm:$0xff]
        %v171 = vld [vmem:[%s130 + $0xe0] sm:$0xff]
        %v172 = vld [vmem:[%s130 + $0xe8] sm:$0xff]
        %v173 = vld [vmem:[%s130 + $0xf0] sm:$0xff]
        %v174 = vld [vmem:[%s130 + $0xf8] sm:$0xff]
        %v175 = vld [vmem:[%s130 + $0x100] sm:$0xff]
        %v176 = vld [vmem:[%s130 + $0x108] sm:$0xff]
        %v177 = vld [vmem:[%s130 + $0x110] sm:$0xff]
        %v178 = vld [vmem:[%s130 + $0x118] sm:$0xff]
        %v179 = vld [vmem:[%s130 + $0x120] sm:$0xff]
        %v180 = vld [vmem:[%s130 + $0x128] sm:$0xff]
        %v181 = vld [vmem:[%s130 + $0x130] sm:$0xff]
        %v182 = vld [vmem:[%s130 + $0x138] sm:$0xff]
        %v183 = vld [vmem:[%s130 + $0x140] sm:$0xff]
        %v184 = vld [vmem:[%s130 + $0x148] sm:$0xff]
        %v185 = vld [vmem:[%s130 + $0x150] sm:$0xff]
        %v186 = vld [vmem:[%s130 + $0x158] sm:$0xff]
        %v187 = vld [vmem:[%s130 + $0x160] sm:$0xff]
        %v188 = vld [vmem:[%s130 + $0x168] sm:$0xff]
        %v189 = vld [vmem:[%s130 + $0x170] sm:$0xff]
        %v190 = vld [vmem:[%s130 + $0x178] sm:$0xff]
        %v191 = vld [vmem:[%s130 + $0x180] sm:$0xff]
        %v192 = vld [vmem:[%s130 + $0x188] sm:$0xff]
        %v193 = vld [vmem:[%s130 + $0x190] sm:$0xff]
        %v194 = vld [vmem:[%s130 + $0x198] sm:$0xff]
        %v195 = vld [vmem:[%s130 + $0x1a0] sm:$0xff]
        %v196 = vld [vmem:[%s130 + $0x1a8] sm:$0xff]
        %v197 = vld [vmem:[%s130 + $0x1b0] sm:$0xff]
        %v198 = vld [vmem:[%s130 + $0x1b8] sm:$0xff]
        %v199 = vld [vmem:[%s130 + $0x1c0] sm:$0xff]
        %v200 = vld [vmem:[%s130 + $0x1c8] sm:$0xff]
        %v201 = vld [vmem:[%s130 + $0x1d0] sm:$0xff]
        %v202 = vld [vmem:[%s130 + $0x1d8] sm:$0xff]
        %v203 = vld [vmem:[%s130 + $0x1e0] sm:$0xff]
        %v204 = vld [vmem:[%s130 + $0x1e8] sm:$0xff]
        %v205 = vld [vmem:[%s130 + $0x1f0] sm:$0xff]
        %v206 = vld [vmem:[%s130 + $0x1f8] sm:$0xff]
        %208 = vset.pattern.permute.xlu0 16
        %209 = vperm.xlu0 %208, %v141
        %v210 = vpop.permute.xlu0 %209
        %213 = vset.pattern.permute.xlu0 16
        %214 = vperm.xlu0 %213, %v142
        %v215 = vpop.permute.xlu0 %214
        %vm217 = vcmask 64512
        %v218 = vsel %vm217, %v141, 0
        %v220 = vsel %vm217, %v142, 0
        %v223 = vsel %vm217, %v143, 0
        %v226 = vsel %vm217, %v144, 0
        %v229 = vsel %vm217, %v145, 0
        %v232 = vsel %vm217, %v146, 0
        %v235 = vsel %vm217, %v147, 0
        %v238 = vsel %vm217, %v148, 0
        %v241 = vsel %vm217, %v149, 0
        %v244 = vsel %vm217, %v150, 0
        %v247 = vsel %vm217, %v151, 0
        %v250 = vsel %vm217, %v152, 0
        %v253 = vsel %vm217, %v153, 0
        %v256 = vsel %vm217, %v154, 0
        %v259 = vsel %vm217, %v155, 0
        %v262 = vsel %vm217, %v156, 0
        %v265 = vsel %vm217, %v157, 0
        %v268 = vsel %vm217, %v158, 0
        %v271 = vsel %vm217, %v159, 0
        %v274 = vsel %vm217, %v160, 0
        %v277 = vsel %vm217, %v161, 0
        %v280 = vsel %vm217, %v162, 0
        %v283 = vsel %vm217, %v163, 0
        %v286 = vsel %vm217, %v164, 0
        %v289 = vsel %vm217, %v165, 0
        %v292 = vsel %vm217, %v166, 0
        %v295 = vsel %vm217, %v167, 0
        %v298 = vsel %vm217, %v168, 0
        %v301 = vsel %vm217, %v169, 0
        %v304 = vsel %vm217, %v170, 0
        %v307 = vsel %vm217, %v171, 0
        %v310 = vsel %vm217, %v172, 0
        %v313 = vsel %vm217, %v173, 0
        %v316 = vsel %vm217, %v174, 0
        %v319 = vsel %vm217, %v175, 0
        %v322 = vsel %vm217, %v176, 0
        %v325 = vsel %vm217, %v177, 0
        %v328 = vsel %vm217, %v178, 0
        %v331 = vsel %vm217, %v179, 0
        %v334 = vsel %vm217, %v180, 0
        %v337 = vsel %vm217, %v181, 0
        %v340 = vsel %vm217, %v182, 0
        %v343 = vsel %vm217, %v183, 0
        %v346 = vsel %vm217, %v184, 0
        %v349 = vsel %vm217, %v185, 0
        %v352 = vsel %vm217, %v186, 0
        %v355 = vsel %vm217, %v187, 0
        %v358 = vsel %vm217, %v188, 0
        %v361 = vsel %vm217, %v189, 0
        %v364 = vsel %vm217, %v190, 0
        %v367 = vsel %vm217, %v191, 0
        %v370 = vsel %vm217, %v192, 0
        %v373 = vsel %vm217, %v193, 0
        %v376 = vsel %vm217, %v194, 0
        %v379 = vsel %vm217, %v195, 0
        %v382 = vsel %vm217, %v196, 0
        %v385 = vsel %vm217, %v197, 0
        %v388 = vsel %vm217, %v198, 0
        %v391 = vsel %vm217, %v199, 0
        %v394 = vsel %vm217, %v200, 0
        %v397 = vsel %vm217, %v201, 0
        %v400 = vsel %vm217, %v202, 0
        %v403 = vsel %vm217, %v203, 0
        %v406 = vsel %vm217, %v204, 0
        %v409 = vsel %vm217, %v205, 0
        %v412 = vsel %vm217, %v206, 0
        %414 = vmatprep.subr.mxu0 0.0
        %415 = vmatpush1.xpose.msra.mxu0 %v268
        %416 = vmatprep.subr.mxu0 0.0
        %417 = vmatpush1.xpose.msra.mxu0 %v265
        %418 = vmatprep.subr.mxu0 0.0
        %419 = vmatpush1.xpose.msra.mxu0 %v262
        %420 = vmatprep.subr.mxu0 0.0
        %421 = vmatpush1.xpose.msra.mxu0 %v259
        %422 = vmatprep.subr.mxu0 0.0
        %423 = vmatpush1.xpose.msra.mxu0 %v256
        %424 = vmatprep.subr.mxu0 0.0
        %425 = vmatpush1.xpose.msra.mxu0 %v253
        %426 = vmatprep.subr.mxu0 0.0
        %427 = vmatpush1.xpose.msra.mxu0 %v250
        %428 = vmatprep.subr.mxu0 0.0
        %429 = vmatpush1.xpose.msra.mxu0 %v247
        %430 = vmatprep.subr.mxu0 0.0
        %431 = vmatpush1.xpose.msra.mxu0 %v244
        %432 = vmatprep.subr.mxu0 0.0
        %433 = vmatpush1.xpose.msra.mxu0 %v241
        %434 = vmatprep.subr.mxu0 0.0
        %435 = vmatpush1.xpose.msra.mxu0 %v238
        %436 = vmatprep.subr.mxu0 0.0
        %437 = vmatpush1.xpose.msra.mxu0 %v235
        %438 = vmatprep.subr.mxu0 0.0
        %439 = vmatpush1.xpose.msra.mxu0 %v232
        %440 = vmatprep.subr.mxu0 0.0
        %441 = vmatpush1.xpose.msra.mxu0 %v229
        %442 = vmatprep.subr.mxu0 0.0
        %443 = vmatpush1.xpose.msra.mxu0 %v226
        %444 = vmatprep.subr.mxu0 0.0
        %445 = vmatpush1.xpose.msra.mxu0 %v223
        %446 = vmatprep.subr.mxu0 0.0
        %447 = vmatpush2.xpose.msra.mxu0 %v316
        %448 = vmatprep.subr.mxu0 0.0
        %449 = vmatpush2.xpose.msra.mxu0 %v313
        %450 = vmatprep.subr.mxu0 0.0
        %451 = vmatpush2.xpose.msra.mxu0 %v310
        %452 = vmatprep.subr.mxu0 0.0
        %453 = vmatpush2.xpose.msra.mxu0 %v307
        %454 = vmatprep.subr.mxu0 0.0
        %455 = vmatpush2.xpose.msra.mxu0 %v304
        %456 = vmatprep.subr.mxu0 0.0
        %457 = vmatpush2.xpose.msra.mxu0 %v301
        %458 = vmatprep.subr.mxu0 0.0
        %459 = vmatpush2.xpose.msra.mxu0 %v298
        %460 = vmatprep.subr.mxu0 0.0
        %461 = vmatpush2.xpose.msra.mxu0 %v295
        %462 = vmatprep.subr.mxu0 0.0
        %463 = vmatpush2.xpose.msra.mxu0 %v292
        %464 = vmatprep.subr.mxu0 0.0
        %465 = vmatpush2.xpose.msra.mxu0 %v289
        %466 = vmatprep.subr.mxu0 0.0
        %467 = vmatpush2.xpose.msra.mxu0 %v286
        %468 = vmatprep.subr.mxu0 0.0
        %469 = vmatpush2.xpose.msra.mxu0 %v283
        %470 = vmatprep.subr.mxu0 0.0
        %471 = vmatpush2.xpose.msra.mxu0 %v280
        %472 = vmatprep.subr.mxu0 0.0
        %473 = vmatpush2.xpose.msra.mxu0 %v277
        %474 = vmatprep.subr.mxu0 0.0
        %475 = vmatpush2.xpose.msra.mxu0 %v274
        %476 = vmatprep.subr.mxu0 0.0
        %477 = vmatpush2.xpose.msra.mxu0 %v271
        %478 = vmatprep.mubr.f32.mxu0 0.0
        %479 = vmatmul.mubr.f32.gmra.mxu0 %v218
        %v480 = vpop.f32.mrf.mxu0
        %v481 = vadd.f32 %v210, %v480
        %v482 = vpop.f32.mrf.mxu0
        %v483 = vadd.f32 %v210, %v482
        %484 = vmatprep.mubr.f32.mxu0 0.0
        %485 = vmatmul.mubr.f32.gmra.mxu0 %v220
        %v486 = vpop.f32.mrf.mxu0
        %v487 = vadd.f32 %v215, %v486
        %v488 = vpop.f32.mrf.mxu0
        %v489 = vadd.f32 %v215, %v488
        %490 = vdwg.mxu0
        %491 = vmatprep.subr.mxu0 0.0
        %492 = vmatpush1.xpose.msra.mxu0 %v364
        %493 = vmatprep.subr.mxu0 0.0
        %494 = vmatpush1.xpose.msra.mxu0 %v361
        %495 = vmatprep.subr.mxu0 0.0
        %496 = vmatpush1.xpose.msra.mxu0 %v358
        %497 = vmatprep.subr.mxu0 0.0
        %498 = vmatpush1.xpose.msra.mxu0 %v355
        %499 = vmatprep.subr.mxu0 0.0
        %500 = vmatpush1.xpose.msra.mxu0 %v352
        %501 = vmatprep.subr.mxu0 0.0
        %502 = vmatpush1.xpose.msra.mxu0 %v349
        %503 = vmatprep.subr.mxu0 0.0
        %504 = vmatpush1.xpose.msra.mxu0 %v346
        %505 = vmatprep.subr.mxu0 0.0
        %506 = vmatpush1.xpose.msra.mxu0 %v343
        %507 = vmatprep.subr.mxu0 0.0
        %508 = vmatpush1.xpose.msra.mxu0 %v340
        %509 = vmatprep.subr.mxu0 0.0
        %510 = vmatpush1.xpose.msra.mxu0 %v337
        %511 = vmatprep.subr.mxu0 0.0
        %512 = vmatpush1.xpose.msra.mxu0 %v334
        %513 = vmatprep.subr.mxu0 0.0
        %514 = vmatpush1.xpose.msra.mxu0 %v331
        %515 = vmatprep.subr.mxu0 0.0
        %516 = vmatpush1.xpose.msra.mxu0 %v328
        %517 = vmatprep.subr.mxu0 0.0
        %518 = vmatpush1.xpose.msra.mxu0 %v325
        %519 = vmatprep.subr.mxu0 0.0
        %520 = vmatpush1.xpose.msra.mxu0 %v322
        %521 = vmatprep.subr.mxu0 0.0
        %522 = vmatpush1.xpose.msra.mxu0 %v319
        %523 = vmatprep.subr.mxu0 0.0
        %524 = vmatpush2.xpose.msra.mxu0 %v412
        %525 = vmatprep.subr.mxu0 0.0
        %526 = vmatpush2.xpose.msra.mxu0 %v409
        %527 = vmatprep.subr.mxu0 0.0
        %528 = vmatpush2.xpose.msra.mxu0 %v406
        %529 = vmatprep.subr.mxu0 0.0
        %530 = vmatpush2.xpose.msra.mxu0 %v403
        %531 = vmatprep.subr.mxu0 0.0
        %532 = vmatpush2.xpose.msra.mxu0 %v400
        %533 = vmatprep.subr.mxu0 0.0
        %534 = vmatpush2.xpose.msra.mxu0 %v397
        %535 = vmatprep.subr.mxu0 0.0
        %536 = vmatpush2.xpose.msra.mxu0 %v394
        %537 = vmatprep.subr.mxu0 0.0
        %538 = vmatpush2.xpose.msra.mxu0 %v391
        %539 = vmatprep.subr.mxu0 0.0
        %540 = vmatpush2.xpose.msra.mxu0 %v388
        %541 = vmatprep.subr.mxu0 0.0
        %542 = vmatpush2.xpose.msra.mxu0 %v385
        %543 = vmatprep.subr.mxu0 0.0
        %544 = vmatpush2.xpose.msra.mxu0 %v382
        %545 = vmatprep.subr.mxu0 0.0
        %546 = vmatpush2.xpose.msra.mxu0 %v379
        %547 = vmatprep.subr.mxu0 0.0
        %548 = vmatpush2.xpose.msra.mxu0 %v376
        %549 = vmatprep.subr.mxu0 0.0
        %550 = vmatpush2.xpose.msra.mxu0 %v373
        %551 = vmatprep.subr.mxu0 0.0
        %552 = vmatpush2.xpose.msra.mxu0 %v370
        %553 = vmatprep.subr.mxu0 0.0
        %554 = vmatpush2.xpose.msra.mxu0 %v367
        %555 = vmatprep.mubr.f32.mxu0 0.0
        %556 = vmatmul.mubr.f32.gmra.mxu0 %v218
        %v557 = vpop.f32.mrf.mxu0
        %v558 = vadd.f32 %v210, %v557
        %v559 = vpop.f32.mrf.mxu0
        %v560 = vadd.f32 %v210, %v559
        %561 = vmatprep.mubr.f32.mxu0 0.0
        %562 = vmatmul.mubr.f32.gmra.mxu0 %v220
        %v563 = vpop.f32.mrf.mxu0
        %v564 = vadd.f32 %v215, %v563
        %v565 = vpop.f32.mrf.mxu0
        %v566 = vadd.f32 %v215, %v565
        %567 = vdwg.mxu0
        %v568 = vmax.f32 %v481, 0.0
        %v569 = vmax.f32 %v483, 0.0
        %v570 = vmax.f32 %v558, 0.0
        %v571 = vmax.f32 %v560, 0.0
        %v572 = vmax.f32 %v487, 0.0
        %v573 = vmax.f32 %v489, 0.0
        %v574 = vmax.f32 %v564, 0.0
        %v575 = vmax.f32 %v566, 0.0
        %s576 = smul.u32 %s14, 8
        %s577 = smul.addr %s576, 8
        %s578 = scalar_lea.vmem [#allocation2], %s577
        %579 = vst [vmem:[%s578] sm:$0xff] %v568
        %580 = vst [vmem:[%s578 + $0x8] sm:$0xff] %v569
        %581 = vst [vmem:[%s578 + $0x10] sm:$0xff] %v570
        %582 = vst [vmem:[%s578 + $0x18] sm:$0xff] %v571
        %583 = vst [vmem:[%s578 + $0x20] sm:$0xff] %v572
        %584 = vst [vmem:[%s578 + $0x28] sm:$0xff] %v573
        %585 = vst [vmem:[%s578 + $0x30] sm:$0xff] %v574
        %586 = vst [vmem:[%s578 + $0x38] sm:$0xff] %v575
        %v587 = vld [vmem:[#allocation3] sm:$0xff]
        %v588 = vld [vmem:[#allocation3 + $0x8] sm:$0xff]
        %v589 = vadd.f32 %v568, %v569
        %v590 = vadd.f32 %v589, %v570
        %v591 = vadd.f32 %v590, %v571
        %592 = vadd.xlane.f32.xlu0 %v591
        %v593 = vpop.xlane.xlu0 %592
        %v594 = vadd.f32 %v572, %v573
        %v595 = vadd.f32 %v594, %v574
        %v596 = vadd.f32 %v595, %v575
        %597 = vadd.xlane.f32.xlu0 %v596
        %v598 = vpop.xlane.xlu0 %597
        %v599 = vadd.f32 %v587, %v593
        %v600 = vadd.f32 %v588, %v598
        %vm601 = vcmask 7168
        %602 = vst.msk [vmem:[#allocation3] sm:$0xff] %vm601, %v599
        %603 = vst.msk [vmem:[#allocation3 + $0x8] sm:$0xff] %vm601, %v600
        %v604 = vld [vmem:[#allocation4] sm:$0xff]
        %v605 = vld [vmem:[#allocation4 + $0x8] sm:$0xff]
        %v606 = vmul.f32 %v568, %v568
        %v607 = vmul.f32 %v569, %v569
        %v608 = vmul.f32 %v570, %v570
        %v609 = vmul.f32 %v571, %v571
        %v610 = vmul.f32 %v572, %v572
        %v611 = vmul.f32 %v573, %v573
        %v612 = vmul.f32 %v574, %v574
        %v613 = vmul.f32 %v575, %v575
        %v614 = vadd.f32 %v606, %v607
        %v615 = vadd.f32 %v614, %v608
        %v616 = vadd.f32 %v615, %v609
        %617 = vadd.xlane.f32.xlu0 %v616
        %v618 = vpop.xlane.xlu0 %617
        %v619 = vadd.f32 %v610, %v611
        %v620 = vadd.f32 %v619, %v612
        %v621 = vadd.f32 %v620, %v613
        %622 = vadd.xlane.f32.xlu0 %v621
        %v623 = vpop.xlane.xlu0 %622
        %v624 = vadd.f32 %v604, %v618
        %v625 = vadd.f32 %v605, %v623
        %626 = vst.msk [vmem:[#allocation4] sm:$0xff] %vm601, %v624
        %627 = vst.msk [vmem:[#allocation4 + $0x8] sm:$0xff] %vm601, %v625
        %p628 = scmp.eq.s32.totalorder %s14, 1
        // Predicated region
        $region33: #{network_sequential_forward.1} parent=27 // pred_check
          %p629 = pneg %p628
        $region34: #{network_sequential_forward.1} parent=27 // pred_check_branch
          %631 = sbr.rel (%p629) target = $region36
        $region35: #{network_sequential_forward.1} parent=27 // pred_region
          %v632 = vld [vmem:[#allocation3] sm:$0xff]
          %v633 = vld [vmem:[#allocation3 + $0x8] sm:$0xff]
          %v634 = vld [vmem:[#allocation4] sm:$0xff]
          %v635 = vld [vmem:[#allocation4 + $0x8] sm:$0xff]
          %v636 = vld [vmem:[%s1] sm:$0xff]
          %v637 = vld [vmem:[%s1 + $0x8] sm:$0xff]
          %v638 = vmul.f32 %v632, 0.0009765625
          %v639 = vmul.f32 %v633, 0.0009765625
          %v640 = vmul.f32 %v634, 0.0009765625
          %v641 = vmul.f32 %v635, 0.0009765625
          %v642 = vmul.f32 %v638, %v638
          %v643 = vmul.f32 %v639, %v639
          %v644 = vsub.f32 %v640, %v642
          %v645 = vsub.f32 %v641, %v643
          %v646 = vmax.f32 %v644, 0.0
          %v647 = vmax.f32 %v645, 0.0
          %v648 = vadd.f32 %v646, 1e-05
          %v649 = vadd.f32 %v647, 1e-05
          %v650 = vrsqrt.pop %v648
          %v651 = vrsqrt.pop %v649
          %654 = vrot.lane.b32.xlu0 %v650, 17
          %v655 = vpop.permute.xlu0 %654
          %656 = vrot.lane.b32.xlu0 %v651, 17
          %v657 = vpop.permute.xlu0 %656
          %v660 = vmul.f32 %v636, %v655
          %v661 = vmul.f32 %v637, %v657
          %664 = vrot.lane.b32.xlu0 %v660, 111
          %v665 = vpop.permute.xlu0 %664
          %666 = vrot.lane.b32.xlu0 %v661, 111
          %v667 = vpop.permute.xlu0 %666
          %v670 = vmul.f32 %v638, %v665
          %v671 = vmul.f32 %v639, %v667
          %674 = vrot.lane.b32.xlu0 %v670, 18
          %v675 = vpop.permute.xlu0 %674
          %676 = vrot.lane.b32.xlu0 %v671, 18
          %v677 = vpop.permute.xlu0 %676
          %v680 = vsub.f32 %v636, %v675
          %v681 = vsub.f32 %v637, %v677
          %s682 = scalar_lea.vmem %s1, 16
          %v683 = vld [vmem:[%s682] sm:$0xff]
          %v684 = vld [vmem:[%s682 + $0x8] sm:$0xff]
          %v685 = vld [vmem:[#allocation2] sm:$0xff]
          %v686 = vld [vmem:[#allocation2 + $0x8] sm:$0xff]
          %v687 = vld [vmem:[#allocation2 + $0x10] sm:$0xff]
          %v688 = vld [vmem:[#allocation2 + $0x18] sm:$0xff]
          %v689 = vld [vmem:[#allocation2 + $0x20] sm:$0xff]
          %v690 = vld [vmem:[#allocation2 + $0x28] sm:$0xff]
          %v691 = vld [vmem:[#allocation2 + $0x30] sm:$0xff]
          %v692 = vld [vmem:[#allocation2 + $0x38] sm:$0xff]
          %693 = vset.pattern.permute.xlu0 17
          %694 = vperm.xlu0 %693, %v660
          %v695 = vpop.permute.xlu0 %694
          %697 = vset.pattern.permute.xlu0 17
          %698 = vperm.xlu0 %697, %v661
          %v699 = vpop.permute.xlu0 %698
          %v701 = vmul.f32 %v685, %v695
          %v702 = vmul.f32 %v686, %v695
          %v703 = vmul.f32 %v687, %v695
          %v704 = vmul.f32 %v688, %v695
          %v705 = vmul.f32 %v689, %v699
          %v706 = vmul.f32 %v690, %v699
          %v707 = vmul.f32 %v691, %v699
          %v708 = vmul.f32 %v692, %v699
          %710 = vset.pattern.permute.xlu0 18
          %711 = vperm.xlu0 %710, %v680
          %v712 = vpop.permute.xlu0 %711
          %715 = vset.pattern.permute.xlu0 18
          %716 = vperm.xlu0 %715, %v681
          %v717 = vpop.permute.xlu0 %716
          %v719 = vadd.f32 %v701, %v712
          %v720 = vadd.f32 %v702, %v712
          %v721 = vadd.f32 %v703, %v712
          %v722 = vadd.f32 %v704, %v712
          %v723 = vadd.f32 %v705, %v717
          %v724 = vadd.f32 %v706, %v717
          %v725 = vadd.f32 %v707, %v717
          %v726 = vadd.f32 %v708, %v717
          %728 = vset.pattern.permute.xlu0 16
          %729 = vperm.xlu0 %728, %v683
          %v730 = vpop.permute.xlu0 %729
          %733 = vset.pattern.permute.xlu0 16
          %734 = vperm.xlu0 %733, %v684
          %v735 = vpop.permute.xlu0 %734
          %vm737 = vcmask 130048
          %v738 = vsel %vm737, %v683, 0
          %v740 = vsel %vm737, %v684, 0
          %742 = vmatprep.subr.mxu0 0.0
          %743 = vmatpush1.msra.mxu0 0.0
          %744 = vmatprep.subr.mxu0 0.0
          %745 = vmatpush1.msra.mxu0 0.0
          %746 = vmatprep.subr.mxu0 0.0
          %747 = vmatpush1.msra.mxu0 0.0
          %748 = vmatprep.subr.mxu0 0.0
          %749 = vmatpush1.msra.mxu0 0.0
          %750 = vmatprep.subr.mxu0 0.0
          %751 = vmatpush1.msra.mxu0 0.0
          %752 = vmatprep.subr.mxu0 0.0
          %753 = vmatpush1.msra.mxu0 0.0
          %754 = vmatprep.subr.mxu0 0.0
          %755 = vmatpush1.msra.mxu0 0.0
          %756 = vmatprep.subr.mxu0 0.0
          %757 = vmatpush1.msra.mxu0 0.0
          %758 = vmatprep.subr.mxu0 0.0
          %759 = vmatpush1.msra.mxu0 0.0
          %760 = vmatprep.subr.mxu0 0.0
          %761 = vmatpush1.msra.mxu0 0.0
          %762 = vmatprep.subr.mxu0 0.0
          %763 = vmatpush1.msra.mxu0 0.0
          %764 = vmatprep.subr.mxu0 0.0
          %765 = vmatpush1.msra.mxu0 0.0
          %766 = vmatprep.subr.mxu0 0.0
          %767 = vmatpush1.msra.mxu0 0.0
          %768 = vmatprep.subr.mxu0 0.0
          %769 = vmatpush1.msra.mxu0 0.0
          %770 = vmatprep.subr.mxu0 %v724
          %771 = vmatpush1.msra.mxu0 %v723
          %772 = vmatprep.subr.mxu0 %v720
          %773 = vmatpush1.msra.mxu0 %v719
          %774 = vmatprep.subr.mxu0 0.0
          %775 = vmatpush2.msra.mxu0 0.0
          %776 = vmatprep.subr.mxu0 0.0
          %777 = vmatpush2.msra.mxu0 0.0
          %778 = vmatprep.subr.mxu0 0.0
          %779 = vmatpush2.msra.mxu0 0.0
          %780 = vmatprep.subr.mxu0 0.0
          %781 = vmatpush2.msra.mxu0 0.0
          %782 = vmatprep.subr.mxu0 0.0
          %783 = vmatpush2.msra.mxu0 0.0
          %784 = vmatprep.subr.mxu0 0.0
          %785 = vmatpush2.msra.mxu0 0.0
          %786 = vmatprep.subr.mxu0 0.0
          %787 = vmatpush2.msra.mxu0 0.0
          %788 = vmatprep.subr.mxu0 0.0
          %789 = vmatpush2.msra.mxu0 0.0
          %790 = vmatprep.subr.mxu0 0.0
          %791 = vmatpush2.msra.mxu0 0.0
          %792 = vmatprep.subr.mxu0 0.0
          %793 = vmatpush2.msra.mxu0 0.0
          %794 = vmatprep.subr.mxu0 0.0
          %795 = vmatpush2.msra.mxu0 0.0
          %796 = vmatprep.subr.mxu0 0.0
          %797 = vmatpush2.msra.mxu0 0.0
          %798 = vmatprep.subr.mxu0 0.0
          %799 = vmatpush2.msra.mxu0 0.0
          %800 = vmatprep.subr.mxu0 0.0
          %801 = vmatpush2.msra.mxu0 0.0
          %802 = vmatprep.subr.mxu0 0.0
          %803 = vmatpush2.msra.mxu0 0.0
          %804 = vmatprep.subr.mxu0 0.0
          %805 = vmatpush2.msra.mxu0 0.0
          %806 = vmatprep.mubr.f32.mxu0 0.0
          %807 = vmatmul.mubr.f32.gmra.mxu0 %v738
          %v808 = vpop.f32.mrf.mxu0
          %v809 = vadd.f32 %v730, %v808
          %v810 = vpop.f32.mrf.mxu0
          %v811 = vadd.f32 %v730, %v810
          %812 = vmatprep.mubr.f32.mxu0 0.0
          %813 = vmatmul.mubr.f32.gmra.mxu0 %v740
          %v814 = vpop.f32.mrf.mxu0
          %v815 = vadd.f32 %v735, %v814
          %v816 = vpop.f32.mrf.mxu0
          %v817 = vadd.f32 %v735, %v816
          %818 = vdwg.mxu0
          %819 = vmatprep.subr.mxu0 0.0
          %820 = vmatpush1.msra.mxu0 0.0
          %821 = vmatprep.subr.mxu0 0.0
          %822 = vmatpush1.msra.mxu0 0.0
          %823 = vmatprep.subr.mxu0 0.0
          %824 = vmatpush1.msra.mxu0 0.0
          %825 = vmatprep.subr.mxu0 0.0
          %826 = vmatpush1.msra.mxu0 0.0
          %827 = vmatprep.subr.mxu0 0.0
          %828 = vmatpush1.msra.mxu0 0.0
          %829 = vmatprep.subr.mxu0 0.0
          %830 = vmatpush1.msra.mxu0 0.0
          %831 = vmatprep.subr.mxu0 0.0
          %832 = vmatpush1.msra.mxu0 0.0
          %833 = vmatprep.subr.mxu0 0.0
          %834 = vmatpush1.msra.mxu0 0.0
          %835 = vmatprep.subr.mxu0 0.0
          %836 = vmatpush1.msra.mxu0 0.0
          %837 = vmatprep.subr.mxu0 0.0
          %838 = vmatpush1.msra.mxu0 0.0
          %839 = vmatprep.subr.mxu0 0.0
          %840 = vmatpush1.msra.mxu0 0.0
          %841 = vmatprep.subr.mxu0 0.0
          %842 = vmatpush1.msra.mxu0 0.0
          %843 = vmatprep.subr.mxu0 0.0
          %844 = vmatpush1.msra.mxu0 0.0
          %845 = vmatprep.subr.mxu0 0.0
          %846 = vmatpush1.msra.mxu0 0.0
          %847 = vmatprep.subr.mxu0 %v726
          %848 = vmatpush1.msra.mxu0 %v725
          %849 = vmatprep.subr.mxu0 %v722
          %850 = vmatpush1.msra.mxu0 %v721
          %851 = vmatprep.subr.mxu0 0.0
          %852 = vmatpush2.msra.mxu0 0.0
          %853 = vmatprep.subr.mxu0 0.0
          %854 = vmatpush2.msra.mxu0 0.0
          %855 = vmatprep.subr.mxu0 0.0
          %856 = vmatpush2.msra.mxu0 0.0
          %857 = vmatprep.subr.mxu0 0.0
          %858 = vmatpush2.msra.mxu0 0.0
          %859 = vmatprep.subr.mxu0 0.0
          %860 = vmatpush2.msra.mxu0 0.0
          %861 = vmatprep.subr.mxu0 0.0
          %862 = vmatpush2.msra.mxu0 0.0
          %863 = vmatprep.subr.mxu0 0.0
          %864 = vmatpush2.msra.mxu0 0.0
          %865 = vmatprep.subr.mxu0 0.0
          %866 = vmatpush2.msra.mxu0 0.0
          %867 = vmatprep.subr.mxu0 0.0
          %868 = vmatpush2.msra.mxu0 0.0
          %869 = vmatprep.subr.mxu0 0.0
          %870 = vmatpush2.msra.mxu0 0.0
          %871 = vmatprep.subr.mxu0 0.0
          %872 = vmatpush2.msra.mxu0 0.0
          %873 = vmatprep.subr.mxu0 0.0
          %874 = vmatpush2.msra.mxu0 0.0
          %875 = vmatprep.subr.mxu0 0.0
          %876 = vmatpush2.msra.mxu0 0.0
          %877 = vmatprep.subr.mxu0 0.0
          %878 = vmatpush2.msra.mxu0 0.0
          %879 = vmatprep.subr.mxu0 0.0
          %880 = vmatpush2.msra.mxu0 0.0
          %881 = vmatprep.subr.mxu0 0.0
          %882 = vmatpush2.msra.mxu0 0.0
          %883 = vmatprep.mubr.f32.mxu0 0.0
          %884 = vmatmul.mubr.f32.gmra.mxu0 %v738
          %v885 = vpop.f32.mrf.mxu0
          %v886 = vadd.f32 %v730, %v885
          %v887 = vpop.f32.mrf.mxu0
          %v888 = vadd.f32 %v730, %v887
          %889 = vmatprep.mubr.f32.mxu0 0.0
          %890 = vmatmul.mubr.f32.gmra.mxu0 %v740
          %v891 = vpop.f32.mrf.mxu0
          %v892 = vadd.f32 %v735, %v891
          %v893 = vpop.f32.mrf.mxu0
          %v894 = vadd.f32 %v735, %v893
          %895 = vdwg.mxu0
          %v896 = vmax.f32 %v809, 0.0
          %v897 = vmax.f32 %v811, 0.0
          %v898 = vmax.f32 %v886, 0.0
          %v899 = vmax.f32 %v888, 0.0
          %v900 = vmax.f32 %v815, 0.0
          %v901 = vmax.f32 %v817, 0.0
          %v902 = vmax.f32 %v892, 0.0
          %v903 = vmax.f32 %v894, 0.0
          %904 = vst [vmem:[#allocation2] sm:$0xff] %v896
          %905 = vst [vmem:[#allocation2 + $0x8] sm:$0xff] %v897
          %906 = vst [vmem:[#allocation2 + $0x10] sm:$0xff] %v898
          %907 = vst [vmem:[#allocation2 + $0x18] sm:$0xff] %v899
          %908 = vst [vmem:[#allocation2 + $0x20] sm:$0xff] %v900
          %909 = vst [vmem:[#allocation2 + $0x28] sm:$0xff] %v901
          %910 = vst [vmem:[#allocation2 + $0x30] sm:$0xff] %v902
          %911 = vst [vmem:[#allocation2 + $0x38] sm:$0xff] %v903
          %v912 = vadd.f32 %v896, %v897
          %v913 = vadd.f32 %v912, %v898
          %v914 = vadd.f32 %v913, %v899
          %915 = vadd.xlane.f32.xlu0 %v914
          %v916 = vpop.xlane.xlu0 %915
          %v917 = vadd.f32 %v900, %v901
          %v918 = vadd.f32 %v917, %v902
          %v919 = vadd.f32 %v918, %v903
          %920 = vadd.xlane.f32.xlu0 %v919
          %v921 = vpop.xlane.xlu0 %920
          %v922 = vadd.f32 %v916, 0.0
          %v923 = vadd.f32 %v921, 0.0
          %v924 = vmul.f32 %v896, %v896
          %v925 = vmul.f32 %v897, %v897
          %v926 = vmul.f32 %v898, %v898
          %v927 = vmul.f32 %v899, %v899
          %v928 = vmul.f32 %v900, %v900
          %v929 = vmul.f32 %v901, %v901
          %v930 = vmul.f32 %v902, %v902
          %v931 = vmul.f32 %v903, %v903
          %v932 = vadd.f32 %v924, %v925
          %v933 = vadd.f32 %v932, %v926
          %v934 = vadd.f32 %v933, %v927
          %935 = vadd.xlane.f32.xlu0 %v934
          %v936 = vpop.xlane.xlu0 %935
          %v937 = vadd.f32 %v928, %v929
          %v938 = vadd.f32 %v937, %v930
          %v939 = vadd.f32 %v938, %v931
          %940 = vadd.xlane.f32.xlu0 %v939
          %v941 = vpop.xlane.xlu0 %940
          %v942 = vadd.f32 %v936, 0.0
          %v943 = vadd.f32 %v941, 0.0
          %s944 = scalar_lea.vmem [#allocation2], 64
          %v945 = vld [vmem:[%s944] sm:$0xff]
          %v946 = vld [vmem:[%s944 + $0x8] sm:$0xff]
          %v947 = vld [vmem:[%s944 + $0x10] sm:$0xff]
          %v948 = vld [vmem:[%s944 + $0x18] sm:$0xff]
          %v949 = vld [vmem:[%s944 + $0x20] sm:$0xff]
          %v950 = vld [vmem:[%s944 + $0x28] sm:$0xff]
          %v951 = vld [vmem:[%s944 + $0x30] sm:$0xff]
          %v952 = vld [vmem:[%s944 + $0x38] sm:$0xff]
          %v953 = vmul.f32 %v945, %v695
          %v954 = vmul.f32 %v946, %v695
          %v955 = vmul.f32 %v947, %v695
          %v956 = vmul.f32 %v948, %v695
          %v957 = vmul.f32 %v949, %v699
          %v958 = vmul.f32 %v950, %v699
          %v959 = vmul.f32 %v951, %v699
          %v960 = vmul.f32 %v952, %v699
          %v961 = vadd.f32 %v953, %v712
          %v962 = vadd.f32 %v954, %v712
          %v963 = vadd.f32 %v955, %v712
          %v964 = vadd.f32 %v956, %v712
          %v965 = vadd.f32 %v957, %v717
          %v966 = vadd.f32 %v958, %v717
          %v967 = vadd.f32 %v959, %v717
          %v968 = vadd.f32 %v960, %v717
          %969 = vmatprep.subr.mxu0 0.0
          %970 = vmatpush1.msra.mxu0 0.0
          %971 = vmatprep.subr.mxu0 0.0
          %972 = vmatpush1.msra.mxu0 0.0
          %973 = vmatprep.subr.mxu0 0.0
          %974 = vmatpush1.msra.mxu0 0.0
          %975 = vmatprep.subr.mxu0 0.0
          %976 = vmatpush1.msra.mxu0 0.0
          %977 = vmatprep.subr.mxu0 0.0
          %978 = vmatpush1.msra.mxu0 0.0
          %979 = vmatprep.subr.mxu0 0.0
          %980 = vmatpush1.msra.mxu0 0.0
          %981 = vmatprep.subr.mxu0 0.0
          %982 = vmatpush1.msra.mxu0 0.0
          %983 = vmatprep.subr.mxu0 0.0
          %984 = vmatpush1.msra.mxu0 0.0
          %985 = vmatprep.subr.mxu0 0.0
          %986 = vmatpush1.msra.mxu0 0.0
          %987 = vmatprep.subr.mxu0 0.0
          %988 = vmatpush1.msra.mxu0 0.0
          %989 = vmatprep.subr.mxu0 0.0
          %990 = vmatpush1.msra.mxu0 0.0
          %991 = vmatprep.subr.mxu0 0.0
          %992 = vmatpush1.msra.mxu0 0.0
          %993 = vmatprep.subr.mxu0 0.0
          %994 = vmatpush1.msra.mxu0 0.0
          %995 = vmatprep.subr.mxu0 0.0
          %996 = vmatpush1.msra.mxu0 0.0
          %997 = vmatprep.subr.mxu0 %v966
          %998 = vmatpush1.msra.mxu0 %v965
          %999 = vmatprep.subr.mxu0 %v962
          %1000 = vmatpush1.msra.mxu0 %v961
          %1001 = vmatprep.subr.mxu0 0.0
          %1002 = vmatpush2.msra.mxu0 0.0
          %1003 = vmatprep.subr.mxu0 0.0
          %1004 = vmatpush2.msra.mxu0 0.0
          %1005 = vmatprep.subr.mxu0 0.0
          %1006 = vmatpush2.msra.mxu0 0.0
          %1007 = vmatprep.subr.mxu0 0.0
          %1008 = vmatpush2.msra.mxu0 0.0
          %1009 = vmatprep.subr.mxu0 0.0
          %1010 = vmatpush2.msra.mxu0 0.0
          %1011 = vmatprep.subr.mxu0 0.0
          %1012 = vmatpush2.msra.mxu0 0.0
          %1013 = vmatprep.subr.mxu0 0.0
          %1014 = vmatpush2.msra.mxu0 0.0
          %1015 = vmatprep.subr.mxu0 0.0
          %1016 = vmatpush2.msra.mxu0 0.0
          %1017 = vmatprep.subr.mxu0 0.0
          %1018 = vmatpush2.msra.mxu0 0.0
          %1019 = vmatprep.subr.mxu0 0.0
          %1020 = vmatpush2.msra.mxu0 0.0
          %1021 = vmatprep.subr.mxu0 0.0
          %1022 = vmatpush2.msra.mxu0 0.0
          %1023 = vmatprep.subr.mxu0 0.0
          %1024 = vmatpush2.msra.mxu0 0.0
          %1025 = vmatprep.subr.mxu0 0.0
          %1026 = vmatpush2.msra.mxu0 0.0
          %1027 = vmatprep.subr.mxu0 0.0
          %1028 = vmatpush2.msra.mxu0 0.0
          %1029 = vmatprep.subr.mxu0 0.0
          %1030 = vmatpush2.msra.mxu0 0.0
          %1031 = vmatprep.subr.mxu0 0.0
          %1032 = vmatpush2.msra.mxu0 0.0
          %1033 = vmatprep.mubr.f32.mxu0 0.0
          %1034 = vmatmul.mubr.f32.gmra.mxu0 %v738
          %v1035 = vpop.f32.mrf.mxu0
          %v1036 = vadd.f32 %v730, %v1035
          %v1037 = vpop.f32.mrf.mxu0
          %v1038 = vadd.f32 %v730, %v1037
          %1039 = vmatprep.mubr.f32.mxu0 0.0
          %1040 = vmatmul.mubr.f32.gmra.mxu0 %v740
          %v1041 = vpop.f32.mrf.mxu0
          %v1042 = vadd.f32 %v735, %v1041
          %v1043 = vpop.f32.mrf.mxu0
          %v1044 = vadd.f32 %v735, %v1043
          %1045 = vdwg.mxu0
          %1046 = vmatprep.subr.mxu0 0.0
          %1047 = vmatpush1.msra.mxu0 0.0
          %1048 = vmatprep.subr.mxu0 0.0
          %1049 = vmatpush1.msra.mxu0 0.0
          %1050 = vmatprep.subr.mxu0 0.0
          %1051 = vmatpush1.msra.mxu0 0.0
          %1052 = vmatprep.subr.mxu0 0.0
          %1053 = vmatpush1.msra.mxu0 0.0
          %1054 = vmatprep.subr.mxu0 0.0
          %1055 = vmatpush1.msra.mxu0 0.0
          %1056 = vmatprep.subr.mxu0 0.0
          %1057 = vmatpush1.msra.mxu0 0.0
          %1058 = vmatprep.subr.mxu0 0.0
          %1059 = vmatpush1.msra.mxu0 0.0
          %1060 = vmatprep.subr.mxu0 0.0
          %1061 = vmatpush1.msra.mxu0 0.0
          %1062 = vmatprep.subr.mxu0 0.0
          %1063 = vmatpush1.msra.mxu0 0.0
          %1064 = vmatprep.subr.mxu0 0.0
          %1065 = vmatpush1.msra.mxu0 0.0
          %1066 = vmatprep.subr.mxu0 0.0
          %1067 = vmatpush1.msra.mxu0 0.0
          %1068 = vmatprep.subr.mxu0 0.0
          %1069 = vmatpush1.msra.mxu0 0.0
          %1070 = vmatprep.subr.mxu0 0.0
          %1071 = vmatpush1.msra.mxu0 0.0
          %1072 = vmatprep.subr.mxu0 0.0
          %1073 = vmatpush1.msra.mxu0 0.0
          %1074 = vmatprep.subr.mxu0 %v968
          %1075 = vmatpush1.msra.mxu0 %v967
          %1076 = vmatprep.subr.mxu0 %v964
          %1077 = vmatpush1.msra.mxu0 %v963
          %1078 = vmatprep.subr.mxu0 0.0
          %1079 = vmatpush2.msra.mxu0 0.0
          %1080 = vmatprep.subr.mxu0 0.0
          %1081 = vmatpush2.msra.mxu0 0.0
          %1082 = vmatprep.subr.mxu0 0.0
          %1083 = vmatpush2.msra.mxu0 0.0
          %1084 = vmatprep.subr.mxu0 0.0
          %1085 = vmatpush2.msra.mxu0 0.0
          %1086 = vmatprep.subr.mxu0 0.0
          %1087 = vmatpush2.msra.mxu0 0.0
          %1088 = vmatprep.subr.mxu0 0.0
          %1089 = vmatpush2.msra.mxu0 0.0
          %1090 = vmatprep.subr.mxu0 0.0
          %1091 = vmatpush2.msra.mxu0 0.0
          %1092 = vmatprep.subr.mxu0 0.0
          %1093 = vmatpush2.msra.mxu0 0.0
          %1094 = vmatprep.subr.mxu0 0.0
          %1095 = vmatpush2.msra.mxu0 0.0
          %1096 = vmatprep.subr.mxu0 0.0
          %1097 = vmatpush2.msra.mxu0 0.0
          %1098 = vmatprep.subr.mxu0 0.0
          %1099 = vmatpush2.msra.mxu0 0.0
          %1100 = vmatprep.subr.mxu0 0.0
          %1101 = vmatpush2.msra.mxu0 0.0
          %1102 = vmatprep.subr.mxu0 0.0
          %1103 = vmatpush2.msra.mxu0 0.0
          %1104 = vmatprep.subr.mxu0 0.0
          %1105 = vmatpush2.msra.mxu0 0.0
          %1106 = vmatprep.subr.mxu0 0.0
          %1107 = vmatpush2.msra.mxu0 0.0
          %1108 = vmatprep.subr.mxu0 0.0
          %1109 = vmatpush2.msra.mxu0 0.0
          %1110 = vmatprep.mubr.f32.mxu0 0.0
          %1111 = vmatmul.mubr.f32.gmra.mxu0 %v738
          %v1112 = vpop.f32.mrf.mxu0
          %v1113 = vadd.f32 %v730, %v1112
          %v1114 = vpop.f32.mrf.mxu0
          %v1115 = vadd.f32 %v730, %v1114
          %1116 = vmatprep.mubr.f32.mxu0 0.0
          %1117 = vmatmul.mubr.f32.gmra.mxu0 %v740
          %v1118 = vpop.f32.mrf.mxu0
          %v1119 = vadd.f32 %v735, %v1118
          %v1120 = vpop.f32.mrf.mxu0
          %v1121 = vadd.f32 %v735, %v1120
          %1122 = vdwg.mxu0
          %v1123 = vmax.f32 %v1036, 0.0
          %v1124 = vmax.f32 %v1038, 0.0
          %v1125 = vmax.f32 %v1113, 0.0
          %v1126 = vmax.f32 %v1115, 0.0
          %v1127 = vmax.f32 %v1042, 0.0
          %v1128 = vmax.f32 %v1044, 0.0
          %v1129 = vmax.f32 %v1119, 0.0
          %v1130 = vmax.f32 %v1121, 0.0
          %1131 = vst [vmem:[%s944] sm:$0xff] %v1123
          %1132 = vst [vmem:[%s944 + $0x8] sm:$0xff] %v1124
          %1133 = vst [vmem:[%s944 + $0x10] sm:$0xff] %v1125
          %1134 = vst [vmem:[%s944 + $0x18] sm:$0xff] %v1126
          %1135 = vst [vmem:[%s944 + $0x20] sm:$0xff] %v1127
          %1136 = vst [vmem:[%s944 + $0x28] sm:$0xff] %v1128
          %1137 = vst [vmem:[%s944 + $0x30] sm:$0xff] %v1129
          %1138 = vst [vmem:[%s944 + $0x38] sm:$0xff] %v1130
          %v1139 = vadd.f32 %v1123, %v1124
          %v1140 = vadd.f32 %v1139, %v1125
          %v1141 = vadd.f32 %v1140, %v1126
          %1142 = vadd.xlane.f32.xlu0 %v1141
          %v1143 = vpop.xlane.xlu0 %1142
          %v1144 = vadd.f32 %v1127, %v1128
          %v1145 = vadd.f32 %v1144, %v1129
          %v1146 = vadd.f32 %v1145, %v1130
          %1147 = vadd.xlane.f32.xlu0 %v1146
          %v1148 = vpop.xlane.xlu0 %1147
          %v1149 = vadd.f32 %v922, %v1143
          %v1150 = vadd.f32 %v923, %v1148
          %v1151 = vmul.f32 %v1123, %v1123
          %v1152 = vmul.f32 %v1124, %v1124
          %v1153 = vmul.f32 %v1125, %v1125
          %v1154 = vmul.f32 %v1126, %v1126
          %v1155 = vmul.f32 %v1127, %v1127
          %v1156 = vmul.f32 %v1128, %v1128
          %v1157 = vmul.f32 %v1129, %v1129
          %v1158 = vmul.f32 %v1130, %v1130
          %v1159 = vadd.f32 %v1151, %v1152
          %v1160 = vadd.f32 %v1159, %v1153
          %v1161 = vadd.f32 %v1160, %v1154
          %1162 = vadd.xlane.f32.xlu0 %v1161
          %v1163 = vpop.xlane.xlu0 %1162
          %v1164 = vadd.f32 %v1155, %v1156
          %v1165 = vadd.f32 %v1164, %v1157
          %v1166 = vadd.f32 %v1165, %v1158
          %1167 = vadd.xlane.f32.xlu0 %v1166
          %v1168 = vpop.xlane.xlu0 %1167
          %v1169 = vadd.f32 %v942, %v1163
          %v1170 = vadd.f32 %v943, %v1168
          %v1171 = vmul.f32 %v1149, 0.0009765625
          %v1172 = vmul.f32 %v1150, 0.0009765625
          %v1173 = vmul.f32 %v1169, 0.0009765625
          %v1174 = vmul.f32 %v1170, 0.0009765625
          %v1175 = vmul.f32 %v1171, %v1171
          %v1176 = vmul.f32 %v1172, %v1172
          %v1177 = vsub.f32 %v1173, %v1175
          %v1178 = vsub.f32 %v1174, %v1176
          %v1179 = vmax.f32 %v1177, 0.0
          %v1180 = vmax.f32 %v1178, 0.0
          %v1181 = vadd.f32 %v1179, 1e-05
          %v1182 = vadd.f32 %v1180, 1e-05
          %v1183 = vrsqrt.pop %v1181
          %v1184 = vrsqrt.pop %v1182
          %v1185 = vmul.f32 %v683, %v1183
          %v1186 = vmul.f32 %v684, %v1184
          %v1187 = vmul.f32 %v1171, %v1185
          %v1188 = vmul.f32 %v1172, %v1186
          %1191 = vrot.lane.b32.xlu0 %v1187, 1
          %v1192 = vpop.permute.xlu0 %1191
          %1193 = vrot.lane.b32.xlu0 %v1188, 1
          %v1194 = vpop.permute.xlu0 %1193
          %v1197 = vsub.f32 %v683, %v1192
          %v1198 = vsub.f32 %v684, %v1194
          %s1199 = scalar_lea.vmem %s1, 32
          %v1200 = vld [vmem:[%s1199] sm:$0xff]
          %v1201 = vld [vmem:[%s1199 + $0x8] sm:$0xff]
          %v1202 = vld [vmem:[#allocation2] sm:$0xff]
          %v1203 = vld [vmem:[#allocation2 + $0x8] sm:$0xff]
          %v1204 = vld [vmem:[#allocation2 + $0x10] sm:$0xff]
          %v1205 = vld [vmem:[#allocation2 + $0x18] sm:$0xff]
          %v1206 = vld [vmem:[#allocation2 + $0x20] sm:$0xff]
          %v1207 = vld [vmem:[#allocation2 + $0x28] sm:$0xff]
          %v1208 = vld [vmem:[#allocation2 + $0x30] sm:$0xff]
          %v1209 = vld [vmem:[#allocation2 + $0x38] sm:$0xff]
          %1211 = vset.pattern.permute.xlu0 17
          %1212 = vperm.xlu0 %1211, %v1185
          %v1213 = vpop.permute.xlu0 %1212
          %1216 = vset.pattern.permute.xlu0 17
          %1217 = vperm.xlu0 %1216, %v1186
          %v1218 = vpop.permute.xlu0 %1217
          %v1220 = vmul.f32 %v1202, %v1213
          %v1221 = vmul.f32 %v1203, %v1213
          %v1222 = vmul.f32 %v1204, %v1213
          %v1223 = vmul.f32 %v1205, %v1213
          %v1224 = vmul.f32 %v1206, %v1218
          %v1225 = vmul.f32 %v1207, %v1218
          %v1226 = vmul.f32 %v1208, %v1218
          %v1227 = vmul.f32 %v1209, %v1218
          %1229 = vset.pattern.permute.xlu0 18
          %1230 = vperm.xlu0 %1229, %v1197
          %v1231 = vpop.permute.xlu0 %1230
          %1234 = vset.pattern.permute.xlu0 18
          %1235 = vperm.xlu0 %1234, %v1198
          %v1236 = vpop.permute.xlu0 %1235
          %v1238 = vadd.f32 %v1220, %v1231
          %v1239 = vadd.f32 %v1221, %v1231
          %v1240 = vadd.f32 %v1222, %v1231
          %v1241 = vadd.f32 %v1223, %v1231
          %v1242 = vadd.f32 %v1224, %v1236
          %v1243 = vadd.f32 %v1225, %v1236
          %v1244 = vadd.f32 %v1226, %v1236
          %v1245 = vadd.f32 %v1227, %v1236
          %1247 = vset.pattern.permute.xlu0 16
          %1248 = vperm.xlu0 %1247, %v1200
          %v1249 = vpop.permute.xlu0 %1248
          %1252 = vset.pattern.permute.xlu0 16
          %1253 = vperm.xlu0 %1252, %v1201
          %v1254 = vpop.permute.xlu0 %1253
          %v1256 = vsel %vm737, %v1200, 0
          %v1258 = vsel %vm737, %v1201, 0
          %1260 = vmatprep.subr.mxu0 0.0
          %1261 = vmatpush1.msra.mxu0 0.0
          %1262 = vmatprep.subr.mxu0 0.0
          %1263 = vmatpush1.msra.mxu0 0.0
          %1264 = vmatprep.subr.mxu0 0.0
          %1265 = vmatpush1.msra.mxu0 0.0
          %1266 = vmatprep.subr.mxu0 0.0
          %1267 = vmatpush1.msra.mxu0 0.0
          %1268 = vmatprep.subr.mxu0 0.0
          %1269 = vmatpush1.msra.mxu0 0.0
          %1270 = vmatprep.subr.mxu0 0.0
          %1271 = vmatpush1.msra.mxu0 0.0
          %1272 = vmatprep.subr.mxu0 0.0
          %1273 = vmatpush1.msra.mxu0 0.0
          %1274 = vmatprep.subr.mxu0 0.0
          %1275 = vmatpush1.msra.mxu0 0.0
          %1276 = vmatprep.subr.mxu0 0.0
          %1277 = vmatpush1.msra.mxu0 0.0
          %1278 = vmatprep.subr.mxu0 0.0
          %1279 = vmatpush1.msra.mxu0 0.0
          %1280 = vmatprep.subr.mxu0 0.0
          %1281 = vmatpush1.msra.mxu0 0.0
          %1282 = vmatprep.subr.mxu0 0.0
          %1283 = vmatpush1.msra.mxu0 0.0
          %1284 = vmatprep.subr.mxu0 0.0
          %1285 = vmatpush1.msra.mxu0 0.0
          %1286 = vmatprep.subr.mxu0 0.0
          %1287 = vmatpush1.msra.mxu0 0.0
          %1288 = vmatprep.subr.mxu0 %v1243
          %1289 = vmatpush1.msra.mxu0 %v1242
          %1290 = vmatprep.subr.mxu0 %v1239
          %1291 = vmatpush1.msra.mxu0 %v1238
          %1292 = vmatprep.subr.mxu0 0.0
          %1293 = vmatpush2.msra.mxu0 0.0
          %1294 = vmatprep.subr.mxu0 0.0
          %1295 = vmatpush2.msra.mxu0 0.0
          %1296 = vmatprep.subr.mxu0 0.0
          %1297 = vmatpush2.msra.mxu0 0.0
          %1298 = vmatprep.subr.mxu0 0.0
          %1299 = vmatpush2.msra.mxu0 0.0
          %1300 = vmatprep.subr.mxu0 0.0
          %1301 = vmatpush2.msra.mxu0 0.0
          %1302 = vmatprep.subr.mxu0 0.0
          %1303 = vmatpush2.msra.mxu0 0.0
          %1304 = vmatprep.subr.mxu0 0.0
          %1305 = vmatpush2.msra.mxu0 0.0
          %1306 = vmatprep.subr.mxu0 0.0
          %1307 = vmatpush2.msra.mxu0 0.0
          %1308 = vmatprep.subr.mxu0 0.0
          %1309 = vmatpush2.msra.mxu0 0.0
          %1310 = vmatprep.subr.mxu0 0.0
          %1311 = vmatpush2.msra.mxu0 0.0
          %1312 = vmatprep.subr.mxu0 0.0
          %1313 = vmatpush2.msra.mxu0 0.0
          %1314 = vmatprep.subr.mxu0 0.0
          %1315 = vmatpush2.msra.mxu0 0.0
          %1316 = vmatprep.subr.mxu0 0.0
          %1317 = vmatpush2.msra.mxu0 0.0
          %1318 = vmatprep.subr.mxu0 0.0
          %1319 = vmatpush2.msra.mxu0 0.0
          %1320 = vmatprep.subr.mxu0 0.0
          %1321 = vmatpush2.msra.mxu0 0.0
          %1322 = vmatprep.subr.mxu0 0.0
          %1323 = vmatpush2.msra.mxu0 0.0
          %1324 = vmatprep.mubr.f32.mxu0 0.0
          %1325 = vmatmul.mubr.f32.gmra.mxu0 %v1256
          %v1326 = vpop.f32.mrf.mxu0
          %v1327 = vadd.f32 %v1249, %v1326
          %v1328 = vpop.f32.mrf.mxu0
          %v1329 = vadd.f32 %v1249, %v1328
          %1330 = vmatprep.mubr.f32.mxu0 0.0
          %1331 = vmatmul.mubr.f32.gmra.mxu0 %v1258
          %v1332 = vpop.f32.mrf.mxu0
          %v1333 = vadd.f32 %v1254, %v1332
          %v1334 = vpop.f32.mrf.mxu0
          %v1335 = vadd.f32 %v1254, %v1334
          %1336 = vdwg.mxu0
          %1337 = vmatprep.subr.mxu0 0.0
          %1338 = vmatpush1.msra.mxu0 0.0
          %1339 = vmatprep.subr.mxu0 0.0
          %1340 = vmatpush1.msra.mxu0 0.0
          %1341 = vmatprep.subr.mxu0 0.0
          %1342 = vmatpush1.msra.mxu0 0.0
          %1343 = vmatprep.subr.mxu0 0.0
          %1344 = vmatpush1.msra.mxu0 0.0
          %1345 = vmatprep.subr.mxu0 0.0
          %1346 = vmatpush1.msra.mxu0 0.0
          %1347 = vmatprep.subr.mxu0 0.0
          %1348 = vmatpush1.msra.mxu0 0.0
          %1349 = vmatprep.subr.mxu0 0.0
          %1350 = vmatpush1.msra.mxu0 0.0
          %1351 = vmatprep.subr.mxu0 0.0
          %1352 = vmatpush1.msra.mxu0 0.0
          %1353 = vmatprep.subr.mxu0 0.0
          %1354 = vmatpush1.msra.mxu0 0.0
          %1355 = vmatprep.subr.mxu0 0.0
          %1356 = vmatpush1.msra.mxu0 0.0
          %1357 = vmatprep.subr.mxu0 0.0
          %1358 = vmatpush1.msra.mxu0 0.0
          %1359 = vmatprep.subr.mxu0 0.0
          %1360 = vmatpush1.msra.mxu0 0.0
          %1361 = vmatprep.subr.mxu0 0.0
          %1362 = vmatpush1.msra.mxu0 0.0
          %1363 = vmatprep.subr.mxu0 0.0
          %1364 = vmatpush1.msra.mxu0 0.0
          %1365 = vmatprep.subr.mxu0 %v1245
          %1366 = vmatpush1.msra.mxu0 %v1244
          %1367 = vmatprep.subr.mxu0 %v1241
          %1368 = vmatpush1.msra.mxu0 %v1240
          %1369 = vmatprep.subr.mxu0 0.0
          %1370 = vmatpush2.msra.mxu0 0.0
          %1371 = vmatprep.subr.mxu0 0.0
          %1372 = vmatpush2.msra.mxu0 0.0
          %1373 = vmatprep.subr.mxu0 0.0
          %1374 = vmatpush2.msra.mxu0 0.0
          %1375 = vmatprep.subr.mxu0 0.0
          %1376 = vmatpush2.msra.mxu0 0.0
          %1377 = vmatprep.subr.mxu0 0.0
          %1378 = vmatpush2.msra.mxu0 0.0
          %1379 = vmatprep.subr.mxu0 0.0
          %1380 = vmatpush2.msra.mxu0 0.0
          %1381 = vmatprep.subr.mxu0 0.0
          %1382 = vmatpush2.msra.mxu0 0.0
          %1383 = vmatprep.subr.mxu0 0.0
          %1384 = vmatpush2.msra.mxu0 0.0
          %1385 = vmatprep.subr.mxu0 0.0
          %1386 = vmatpush2.msra.mxu0 0.0
          %1387 = vmatprep.subr.mxu0 0.0
          %1388 = vmatpush2.msra.mxu0 0.0
          %1389 = vmatprep.subr.mxu0 0.0
          %1390 = vmatpush2.msra.mxu0 0.0
          %1391 = vmatprep.subr.mxu0 0.0
          %1392 = vmatpush2.msra.mxu0 0.0
          %1393 = vmatprep.subr.mxu0 0.0
          %1394 = vmatpush2.msra.mxu0 0.0
          %1395 = vmatprep.subr.mxu0 0.0
          %1396 = vmatpush2.msra.mxu0 0.0
          %1397 = vmatprep.subr.mxu0 0.0
          %1398 = vmatpush2.msra.mxu0 0.0
          %1399 = vmatprep.subr.mxu0 0.0
          %1400 = vmatpush2.msra.mxu0 0.0
          %1401 = vmatprep.mubr.f32.mxu0 0.0
          %1402 = vmatmul.mubr.f32.gmra.mxu0 %v1256
          %v1403 = vpop.f32.mrf.mxu0
          %v1404 = vadd.f32 %v1249, %v1403
          %v1405 = vpop.f32.mrf.mxu0
          %v1406 = vadd.f32 %v1249, %v1405
          %1407 = vmatprep.mubr.f32.mxu0 0.0
          %1408 = vmatmul.mubr.f32.gmra.mxu0 %v1258
          %v1409 = vpop.f32.mrf.mxu0
          %v1410 = vadd.f32 %v1254, %v1409
          %v1411 = vpop.f32.mrf.mxu0
          %v1412 = vadd.f32 %v1254, %v1411
          %1413 = vdwg.mxu0
          %v1414 = vmax.f32 %v1327, 0.0
          %v1415 = vmax.f32 %v1329, 0.0
          %v1416 = vmax.f32 %v1404, 0.0
          %v1417 = vmax.f32 %v1406, 0.0
          %v1418 = vmax.f32 %v1333, 0.0
          %v1419 = vmax.f32 %v1335, 0.0
          %v1420 = vmax.f32 %v1410, 0.0
          %v1421 = vmax.f32 %v1412, 0.0
          %1422 = vst [vmem:[#allocation2] sm:$0xff] %v1414
          %1423 = vst [vmem:[#allocation2 + $0x8] sm:$0xff] %v1415
          %1424 = vst [vmem:[#allocation2 + $0x10] sm:$0xff] %v1416
          %1425 = vst [vmem:[#allocation2 + $0x18] sm:$0xff] %v1417
          %1426 = vst [vmem:[#allocation2 + $0x20] sm:$0xff] %v1418
          %1427 = vst [vmem:[#allocation2 + $0x28] sm:$0xff] %v1419
          %1428 = vst [vmem:[#allocation2 + $0x30] sm:$0xff] %v1420
          %1429 = vst [vmem:[#allocation2 + $0x38] sm:$0xff] %v1421
          %v1430 = vadd.f32 %v1414, %v1415
          %v1431 = vadd.f32 %v1430, %v1416
          %v1432 = vadd.f32 %v1431, %v1417
          %1433 = vadd.xlane.f32.xlu0 %v1432
          %v1434 = vpop.xlane.xlu0 %1433
          %v1435 = vadd.f32 %v1418, %v1419
          %v1436 = vadd.f32 %v1435, %v1420
          %v1437 = vadd.f32 %v1436, %v1421
          %1438 = vadd.xlane.f32.xlu0 %v1437
          %v1439 = vpop.xlane.xlu0 %1438
          %v1440 = vadd.f32 %v1434, 0.0
          %v1441 = vadd.f32 %v1439, 0.0
          %v1442 = vmul.f32 %v1414, %v1414
          %v1443 = vmul.f32 %v1415, %v1415
          %v1444 = vmul.f32 %v1416, %v1416
          %v1445 = vmul.f32 %v1417, %v1417
          %v1446 = vmul.f32 %v1418, %v1418
          %v1447 = vmul.f32 %v1419, %v1419
          %v1448 = vmul.f32 %v1420, %v1420
          %v1449 = vmul.f32 %v1421, %v1421
          %v1450 = vadd.f32 %v1442, %v1443
          %v1451 = vadd.f32 %v1450, %v1444
          %v1452 = vadd.f32 %v1451, %v1445
          %1453 = vadd.xlane.f32.xlu0 %v1452
          %v1454 = vpop.xlane.xlu0 %1453
          %v1455 = vadd.f32 %v1446, %v1447
          %v1456 = vadd.f32 %v1455, %v1448
          %v1457 = vadd.f32 %v1456, %v1449
          %1458 = vadd.xlane.f32.xlu0 %v1457
          %v1459 = vpop.xlane.xlu0 %1458
          %v1460 = vadd.f32 %v1454, 0.0
          %v1461 = vadd.f32 %v1459, 0.0
          %v1462 = vld [vmem:[%s944] sm:$0xff]
          %v1463 = vld [vmem:[%s944 + $0x8] sm:$0xff]
          %v1464 = vld [vmem:[%s944 + $0x10] sm:$0xff]
          %v1465 = vld [vmem:[%s944 + $0x18] sm:$0xff]
          %v1466 = vld [vmem:[%s944 + $0x20] sm:$0xff]
          %v1467 = vld [vmem:[%s944 + $0x28] sm:$0xff]
          %v1468 = vld [vmem:[%s944 + $0x30] sm:$0xff]
          %v1469 = vld [vmem:[%s944 + $0x38] sm:$0xff]
          %v1470 = vmul.f32 %v1462, %v1213
          %v1471 = vmul.f32 %v1463, %v1213
          %v1472 = vmul.f32 %v1464, %v1213
          %v1473 = vmul.f32 %v1465, %v1213
          %v1474 = vmul.f32 %v1466, %v1218
          %v1475 = vmul.f32 %v1467, %v1218
          %v1476 = vmul.f32 %v1468, %v1218
          %v1477 = vmul.f32 %v1469, %v1218
          %v1478 = vadd.f32 %v1470, %v1231
          %v1479 = vadd.f32 %v1471, %v1231
          %v1480 = vadd.f32 %v1472, %v1231
          %v1481 = vadd.f32 %v1473, %v1231
          %v1482 = vadd.f32 %v1474, %v1236
          %v1483 = vadd.f32 %v1475, %v1236
          %v1484 = vadd.f32 %v1476, %v1236
          %v1485 = vadd.f32 %v1477, %v1236
          %1486 = vmatprep.subr.mxu0 0.0
          %1487 = vmatpush1.msra.mxu0 0.0
          %1488 = vmatprep.subr.mxu0 0.0
          %1489 = vmatpush1.msra.mxu0 0.0
          %1490 = vmatprep.subr.mxu0 0.0
          %1491 = vmatpush1.msra.mxu0 0.0
          %1492 = vmatprep.subr.mxu0 0.0
          %1493 = vmatpush1.msra.mxu0 0.0
          %1494 = vmatprep.subr.mxu0 0.0
          %1495 = vmatpush1.msra.mxu0 0.0
          %1496 = vmatprep.subr.mxu0 0.0
          %1497 = vmatpush1.msra.mxu0 0.0
          %1498 = vmatprep.subr.mxu0 0.0
          %1499 = vmatpush1.msra.mxu0 0.0
          %1500 = vmatprep.subr.mxu0 0.0
          %1501 = vmatpush1.msra.mxu0 0.0
          %1502 = vmatprep.subr.mxu0 0.0
          %1503 = vmatpush1.msra.mxu0 0.0
          %1504 = vmatprep.subr.mxu0 0.0
          %1505 = vmatpush1.msra.mxu0 0.0
          %1506 = vmatprep.subr.mxu0 0.0
          %1507 = vmatpush1.msra.mxu0 0.0
          %1508 = vmatprep.subr.mxu0 0.0
          %1509 = vmatpush1.msra.mxu0 0.0
          %1510 = vmatprep.subr.mxu0 0.0
          %1511 = vmatpush1.msra.mxu0 0.0
          %1512 = vmatprep.subr.mxu0 0.0
          %1513 = vmatpush1.msra.mxu0 0.0
          %1514 = vmatprep.subr.mxu0 %v1483
          %1515 = vmatpush1.msra.mxu0 %v1482
          %1516 = vmatprep.subr.mxu0 %v1479
          %1517 = vmatpush1.msra.mxu0 %v1478
          %1518 = vmatprep.subr.mxu0 0.0
          %1519 = vmatpush2.msra.mxu0 0.0
          %1520 = vmatprep.subr.mxu0 0.0
          %1521 = vmatpush2.msra.mxu0 0.0
          %1522 = vmatprep.subr.mxu0 0.0
          %1523 = vmatpush2.msra.mxu0 0.0
          %1524 = vmatprep.subr.mxu0 0.0
          %1525 = vmatpush2.msra.mxu0 0.0
          %1526 = vmatprep.subr.mxu0 0.0
          %1527 = vmatpush2.msra.mxu0 0.0
          %1528 = vmatprep.subr.mxu0 0.0
          %1529 = vmatpush2.msra.mxu0 0.0
          %1530 = vmatprep.subr.mxu0 0.0
          %1531 = vmatpush2.msra.mxu0 0.0
          %1532 = vmatprep.subr.mxu0 0.0
          %1533 = vmatpush2.msra.mxu0 0.0
          %1534 = vmatprep.subr.mxu0 0.0
          %1535 = vmatpush2.msra.mxu0 0.0
          %1536 = vmatprep.subr.mxu0 0.0
          %1537 = vmatpush2.msra.mxu0 0.0
          %1538 = vmatprep.subr.mxu0 0.0
          %1539 = vmatpush2.msra.mxu0 0.0
          %1540 = vmatprep.subr.mxu0 0.0
          %1541 = vmatpush2.msra.mxu0 0.0
          %1542 = vmatprep.subr.mxu0 0.0
          %1543 = vmatpush2.msra.mxu0 0.0
          %1544 = vmatprep.subr.mxu0 0.0
          %1545 = vmatpush2.msra.mxu0 0.0
          %1546 = vmatprep.subr.mxu0 0.0
          %1547 = vmatpush2.msra.mxu0 0.0
          %1548 = vmatprep.subr.mxu0 0.0
          %1549 = vmatpush2.msra.mxu0 0.0
          %1550 = vmatprep.mubr.f32.mxu0 0.0
          %1551 = vmatmul.mubr.f32.gmra.mxu0 %v1256
          %v1552 = vpop.f32.mrf.mxu0
          %v1553 = vadd.f32 %v1249, %v1552
          %v1554 = vpop.f32.mrf.mxu0
          %v1555 = vadd.f32 %v1249, %v1554
          %1556 = vmatprep.mubr.f32.mxu0 0.0
          %1557 = vmatmul.mubr.f32.gmra.mxu0 %v1258
          %v1558 = vpop.f32.mrf.mxu0
          %v1559 = vadd.f32 %v1254, %v1558
          %v1560 = vpop.f32.mrf.mxu0
          %v1561 = vadd.f32 %v1254, %v1560
          %1562 = vdwg.mxu0
          %1563 = vmatprep.subr.mxu0 0.0
          %1564 = vmatpush1.msra.mxu0 0.0
          %1565 = vmatprep.subr.mxu0 0.0
          %1566 = vmatpush1.msra.mxu0 0.0
          %1567 = vmatprep.subr.mxu0 0.0
          %1568 = vmatpush1.msra.mxu0 0.0
          %1569 = vmatprep.subr.mxu0 0.0
          %1570 = vmatpush1.msra.mxu0 0.0
          %1571 = vmatprep.subr.mxu0 0.0
          %1572 = vmatpush1.msra.mxu0 0.0
          %1573 = vmatprep.subr.mxu0 0.0
          %1574 = vmatpush1.msra.mxu0 0.0
          %1575 = vmatprep.subr.mxu0 0.0
          %1576 = vmatpush1.msra.mxu0 0.0
          %1577 = vmatprep.subr.mxu0 0.0
          %1578 = vmatpush1.msra.mxu0 0.0
          %1579 = vmatprep.subr.mxu0 0.0
          %1580 = vmatpush1.msra.mxu0 0.0
          %1581 = vmatprep.subr.mxu0 0.0
          %1582 = vmatpush1.msra.mxu0 0.0
          %1583 = vmatprep.subr.mxu0 0.0
          %1584 = vmatpush1.msra.mxu0 0.0
          %1585 = vmatprep.subr.mxu0 0.0
          %1586 = vmatpush1.msra.mxu0 0.0
          %1587 = vmatprep.subr.mxu0 0.0
          %1588 = vmatpush1.msra.mxu0 0.0
          %1589 = vmatprep.subr.mxu0 0.0
          %1590 = vmatpush1.msra.mxu0 0.0
          %1591 = vmatprep.subr.mxu0 %v1485
          %1592 = vmatpush1.msra.mxu0 %v1484
          %1593 = vmatprep.subr.mxu0 %v1481
          %1594 = vmatpush1.msra.mxu0 %v1480
          %1595 = vmatprep.subr.mxu0 0.0
          %1596 = vmatpush2.msra.mxu0 0.0
          %1597 = vmatprep.subr.mxu0 0.0
          %1598 = vmatpush2.msra.mxu0 0.0
          %1599 = vmatprep.subr.mxu0 0.0
          %1600 = vmatpush2.msra.mxu0 0.0
          %1601 = vmatprep.subr.mxu0 0.0
          %1602 = vmatpush2.msra.mxu0 0.0
          %1603 = vmatprep.subr.mxu0 0.0
          %1604 = vmatpush2.msra.mxu0 0.0
          %1605 = vmatprep.subr.mxu0 0.0
          %1606 = vmatpush2.msra.mxu0 0.0
          %1607 = vmatprep.subr.mxu0 0.0
          %1608 = vmatpush2.msra.mxu0 0.0
          %1609 = vmatprep.subr.mxu0 0.0
          %1610 = vmatpush2.msra.mxu0 0.0
          %1611 = vmatprep.subr.mxu0 0.0
          %1612 = vmatpush2.msra.mxu0 0.0
          %1613 = vmatprep.subr.mxu0 0.0
          %1614 = vmatpush2.msra.mxu0 0.0
          %1615 = vmatprep.subr.mxu0 0.0
          %1616 = vmatpush2.msra.mxu0 0.0
          %1617 = vmatprep.subr.mxu0 0.0
          %1618 = vmatpush2.msra.mxu0 0.0
          %1619 = vmatprep.subr.mxu0 0.0
          %1620 = vmatpush2.msra.mxu0 0.0
          %1621 = vmatprep.subr.mxu0 0.0
          %1622 = vmatpush2.msra.mxu0 0.0
          %1623 = vmatprep.subr.mxu0 0.0
          %1624 = vmatpush2.msra.mxu0 0.0
          %1625 = vmatprep.subr.mxu0 0.0
          %1626 = vmatpush2.msra.mxu0 0.0
          %1627 = vmatprep.mubr.f32.mxu0 0.0
          %1628 = vmatmul.mubr.f32.gmra.mxu0 %v1256
          %v1629 = vpop.f32.mrf.mxu0
          %v1630 = vadd.f32 %v1249, %v1629
          %v1631 = vpop.f32.mrf.mxu0
          %v1632 = vadd.f32 %v1249, %v1631
          %1633 = vmatprep.mubr.f32.mxu0 0.0
          %1634 = vmatmul.mubr.f32.gmra.mxu0 %v1258
          %v1635 = vpop.f32.mrf.mxu0
          %v1636 = vadd.f32 %v1254, %v1635
          %v1637 = vpop.f32.mrf.mxu0
          %v1638 = vadd.f32 %v1254, %v1637
          %1639 = vdwg.mxu0
          %v1640 = vmax.f32 %v1553, 0.0
          %v1641 = vmax.f32 %v1555, 0.0
          %v1642 = vmax.f32 %v1630, 0.0
          %v1643 = vmax.f32 %v1632, 0.0
          %v1644 = vmax.f32 %v1559, 0.0
          %v1645 = vmax.f32 %v1561, 0.0
          %v1646 = vmax.f32 %v1636, 0.0
          %v1647 = vmax.f32 %v1638, 0.0
          %1648 = vst [vmem:[%s944] sm:$0xff] %v1640
          %1649 = vst [vmem:[%s944 + $0x8] sm:$0xff] %v1641
          %1650 = vst [vmem:[%s944 + $0x10] sm:$0xff] %v1642
          %1651 = vst [vmem:[%s944 + $0x18] sm:$0xff] %v1643
          %1652 = vst [vmem:[%s944 + $0x20] sm:$0xff] %v1644
          %1653 = vst [vmem:[%s944 + $0x28] sm:$0xff] %v1645
          %1654 = vst [vmem:[%s944 + $0x30] sm:$0xff] %v1646
          %1655 = vst [vmem:[%s944 + $0x38] sm:$0xff] %v1647
          %v1656 = vadd.f32 %v1640, %v1641
          %v1657 = vadd.f32 %v1656, %v1642
          %v1658 = vadd.f32 %v1657, %v1643
          %1659 = vadd.xlane.f32.xlu0 %v1658
          %v1660 = vpop.xlane.xlu0 %1659
          %v1661 = vadd.f32 %v1644, %v1645
          %v1662 = vadd.f32 %v1661, %v1646
          %v1663 = vadd.f32 %v1662, %v1647
          %1664 = vadd.xlane.f32.xlu0 %v1663
          %v1665 = vpop.xlane.xlu0 %1664
          %v1666 = vadd.f32 %v1440, %v1660
          %v1667 = vadd.f32 %v1441, %v1665
          %v1668 = vmul.f32 %v1640, %v1640
          %v1669 = vmul.f32 %v1641, %v1641
          %v1670 = vmul.f32 %v1642, %v1642
          %v1671 = vmul.f32 %v1643, %v1643
          %v1672 = vmul.f32 %v1644, %v1644
          %v1673 = vmul.f32 %v1645, %v1645
          %v1674 = vmul.f32 %v1646, %v1646
          %v1675 = vmul.f32 %v1647, %v1647
          %v1676 = vadd.f32 %v1668, %v1669
          %v1677 = vadd.f32 %v1676, %v1670
          %v1678 = vadd.f32 %v1677, %v1671
          %1679 = vadd.xlane.f32.xlu0 %v1678
          %v1680 = vpop.xlane.xlu0 %1679
          %v1681 = vadd.f32 %v1672, %v1673
          %v1682 = vadd.f32 %v1681, %v1674
          %v1683 = vadd.f32 %v1682, %v1675
          %1684 = vadd.xlane.f32.xlu0 %v1683
          %v1685 = vpop.xlane.xlu0 %1684
          %v1686 = vadd.f32 %v1460, %v1680
          %v1687 = vadd.f32 %v1461, %v1685
          %v1688 = vmul.f32 %v1666, 0.0009765625
          %v1689 = vmul.f32 %v1667, 0.0009765625
          %v1690 = vmul.f32 %v1686, 0.0009765625
          %v1691 = vmul.f32 %v1687, 0.0009765625
          %v1692 = vmul.f32 %v1688, %v1688
          %v1693 = vmul.f32 %v1689, %v1689
          %v1694 = vsub.f32 %v1690, %v1692
          %v1695 = vsub.f32 %v1691, %v1693
          %v1696 = vmax.f32 %v1694, 0.0
          %v1697 = vmax.f32 %v1695, 0.0
          %v1698 = vadd.f32 %v1696, 1e-05
          %v1699 = vadd.f32 %v1697, 1e-05
          %v1700 = vrsqrt.pop %v1698
          %v1701 = vrsqrt.pop %v1699
          %v1702 = vmul.f32 %v1200, %v1700
          %v1703 = vmul.f32 %v1201, %v1701
          %v1704 = vmul.f32 %v1688, %v1702
          %v1705 = vmul.f32 %v1689, %v1703
          %1708 = vrot.lane.b32.xlu0 %v1704, 1
          %v1709 = vpop.permute.xlu0 %1708
          %1710 = vrot.lane.b32.xlu0 %v1705, 1
          %v1711 = vpop.permute.xlu0 %1710
          %v1714 = vsub.f32 %v1200, %v1709
          %v1715 = vsub.f32 %v1201, %v1711
          %s1716 = scalar_lea.vmem %s1, 48
          %v1717 = vld [vmem:[%s1716] sm:$0xff]
          %v1718 = vld [vmem:[%s1716 + $0x8] sm:$0xff]
          %v1719 = vld [vmem:[#allocation2] sm:$0xff]
          %v1720 = vld [vmem:[#allocation2 + $0x8] sm:$0xff]
          %v1721 = vld [vmem:[#allocation2 + $0x10] sm:$0xff]
          %v1722 = vld [vmem:[#allocation2 + $0x18] sm:$0xff]
          %v1723 = vld [vmem:[#allocation2 + $0x20] sm:$0xff]
          %v1724 = vld [vmem:[#allocation2 + $0x28] sm:$0xff]
          %v1725 = vld [vmem:[#allocation2 + $0x30] sm:$0xff]
          %v1726 = vld [vmem:[#allocation2 + $0x38] sm:$0xff]
          %1728 = vset.pattern.permute.xlu0 17
          %1729 = vperm.xlu0 %1728, %v1702
          %v1730 = vpop.permute.xlu0 %1729
          %1733 = vset.pattern.permute.xlu0 17
          %1734 = vperm.xlu0 %1733, %v1703
          %v1735 = vpop.permute.xlu0 %1734
          %v1737 = vmul.f32 %v1719, %v1730
          %v1738 = vmul.f32 %v1720, %v1730
          %v1739 = vmul.f32 %v1721, %v1730
          %v1740 = vmul.f32 %v1722, %v1730
          %v1741 = vmul.f32 %v1723, %v1735
          %v1742 = vmul.f32 %v1724, %v1735
          %v1743 = vmul.f32 %v1725, %v1735
          %v1744 = vmul.f32 %v1726, %v1735
          %1746 = vset.pattern.permute.xlu0 18
          %1747 = vperm.xlu0 %1746, %v1714
          %v1748 = vpop.permute.xlu0 %1747
          %1751 = vset.pattern.permute.xlu0 18
          %1752 = vperm.xlu0 %1751, %v1715
          %v1753 = vpop.permute.xlu0 %1752
          %v1755 = vadd.f32 %v1737, %v1748
          %v1756 = vadd.f32 %v1738, %v1748
          %v1757 = vadd.f32 %v1739, %v1748
          %v1758 = vadd.f32 %v1740, %v1748
          %v1759 = vadd.f32 %v1741, %v1753
          %v1760 = vadd.f32 %v1742, %v1753
          %v1761 = vadd.f32 %v1743, %v1753
          %v1762 = vadd.f32 %v1744, %v1753
          %1764 = vset.pattern.permute.xlu0 16
          %1765 = vperm.xlu0 %1764, %v1717
          %v1766 = vpop.permute.xlu0 %1765
          %1769 = vset.pattern.permute.xlu0 16
          %1770 = vperm.xlu0 %1769, %v1718
          %v1771 = vpop.permute.xlu0 %1770
          %v1772 = vsel %vm737, %v1717, 0
          %v1774 = vsel %vm737, %v1718, 0
          %1776 = vmatprep.subr.mxu0 0.0
          %1777 = vmatpush1.msra.mxu0 0.0
          %1778 = vmatprep.subr.mxu0 0.0
          %1779 = vmatpush1.msra.mxu0 0.0
          %1780 = vmatprep.subr.mxu0 0.0
          %1781 = vmatpush1.msra.mxu0 0.0
          %1782 = vmatprep.subr.mxu0 0.0
          %1783 = vmatpush1.msra.mxu0 0.0
          %1784 = vmatprep.subr.mxu0 0.0
          %1785 = vmatpush1.msra.mxu0 0.0
          %1786 = vmatprep.subr.mxu0 0.0
          %1787 = vmatpush1.msra.mxu0 0.0
          %1788 = vmatprep.subr.mxu0 0.0
          %1789 = vmatpush1.msra.mxu0 0.0
          %1790 = vmatprep.subr.mxu0 0.0
          %1791 = vmatpush1.msra.mxu0 0.0
          %1792 = vmatprep.subr.mxu0 0.0
          %1793 = vmatpush1.msra.mxu0 0.0
          %1794 = vmatprep.subr.mxu0 0.0
          %1795 = vmatpush1.msra.mxu0 0.0
          %1796 = vmatprep.subr.mxu0 0.0
          %1797 = vmatpush1.msra.mxu0 0.0
          %1798 = vmatprep.subr.mxu0 0.0
          %1799 = vmatpush1.msra.mxu0 0.0
          %1800 = vmatprep.subr.mxu0 0.0
          %1801 = vmatpush1.msra.mxu0 0.0
          %1802 = vmatprep.subr.mxu0 0.0
          %1803 = vmatpush1.msra.mxu0 0.0
          %1804 = vmatprep.subr.mxu0 %v1760
          %1805 = vmatpush1.msra.mxu0 %v1759
          %1806 = vmatprep.subr.mxu0 %v1756
          %1807 = vmatpush1.msra.mxu0 %v1755
          %1808 = vmatprep.subr.mxu0 0.0
          %1809 = vmatpush2.msra.mxu0 0.0
          %1810 = vmatprep.subr.mxu0 0.0
          %1811 = vmatpush2.msra.mxu0 0.0
          %1812 = vmatprep.subr.mxu0 0.0
          %1813 = vmatpush2.msra.mxu0 0.0
          %1814 = vmatprep.subr.mxu0 0.0
          %1815 = vmatpush2.msra.mxu0 0.0
          %1816 = vmatprep.subr.mxu0 0.0
          %1817 = vmatpush2.msra.mxu0 0.0
          %1818 = vmatprep.subr.mxu0 0.0
          %1819 = vmatpush2.msra.mxu0 0.0
          %1820 = vmatprep.subr.mxu0 0.0
          %1821 = vmatpush2.msra.mxu0 0.0
          %1822 = vmatprep.subr.mxu0 0.0
          %1823 = vmatpush2.msra.mxu0 0.0
          %1824 = vmatprep.subr.mxu0 0.0
          %1825 = vmatpush2.msra.mxu0 0.0
          %1826 = vmatprep.subr.mxu0 0.0
          %1827 = vmatpush2.msra.mxu0 0.0
          %1828 = vmatprep.subr.mxu0 0.0
          %1829 = vmatpush2.msra.mxu0 0.0
          %1830 = vmatprep.subr.mxu0 0.0
          %1831 = vmatpush2.msra.mxu0 0.0
          %1832 = vmatprep.subr.mxu0 0.0
          %1833 = vmatpush2.msra.mxu0 0.0
          %1834 = vmatprep.subr.mxu0 0.0
          %1835 = vmatpush2.msra.mxu0 0.0
          %1836 = vmatprep.subr.mxu0 0.0
          %1837 = vmatpush2.msra.mxu0 0.0
          %1838 = vmatprep.subr.mxu0 0.0
          %1839 = vmatpush2.msra.mxu0 0.0
          %1840 = vmatprep.mubr.f32.mxu0 0.0
          %1841 = vmatmul.mubr.f32.gmra.mxu0 %v1772
          %v1842 = vpop.f32.mrf.mxu0
          %v1843 = vadd.f32 %v1766, %v1842
          %v1844 = vpop.f32.mrf.mxu0
          %v1845 = vadd.f32 %v1766, %v1844
          %1846 = vmatprep.mubr.f32.mxu0 0.0
          %1847 = vmatmul.mubr.f32.gmra.mxu0 %v1774
          %v1848 = vpop.f32.mrf.mxu0
          %v1849 = vpop.f32.mrf.mxu0
          %1850 = vdwg.mxu0
          %1851 = vmatprep.subr.mxu0 0.0
          %1852 = vmatpush1.msra.mxu0 0.0
          %1853 = vmatprep.subr.mxu0 0.0
          %1854 = vmatpush1.msra.mxu0 0.0
          %1855 = vmatprep.subr.mxu0 0.0
          %1856 = vmatpush1.msra.mxu0 0.0
          %1857 = vmatprep.subr.mxu0 0.0
          %1858 = vmatpush1.msra.mxu0 0.0
          %1859 = vmatprep.subr.mxu0 0.0
          %1860 = vmatpush1.msra.mxu0 0.0
          %1861 = vmatprep.subr.mxu0 0.0
          %1862 = vmatpush1.msra.mxu0 0.0
          %1863 = vmatprep.subr.mxu0 0.0
          %1864 = vmatpush1.msra.mxu0 0.0
          %1865 = vmatprep.subr.mxu0 0.0
          %1866 = vmatpush1.msra.mxu0 0.0
          %1867 = vmatprep.subr.mxu0 0.0
          %1868 = vmatpush1.msra.mxu0 0.0
          %1869 = vmatprep.subr.mxu0 0.0
          %1870 = vmatpush1.msra.mxu0 0.0
          %1871 = vmatprep.subr.mxu0 0.0
          %1872 = vmatpush1.msra.mxu0 0.0
          %1873 = vmatprep.subr.mxu0 0.0
          %1874 = vmatpush1.msra.mxu0 0.0
          %1875 = vmatprep.subr.mxu0 0.0
          %1876 = vmatpush1.msra.mxu0 0.0
          %1877 = vmatprep.subr.mxu0 0.0
          %1878 = vmatpush1.msra.mxu0 0.0
          %1879 = vmatprep.subr.mxu0 %v1762
          %1880 = vmatpush1.msra.mxu0 %v1761
          %1881 = vmatprep.subr.mxu0 %v1758
          %1882 = vmatpush1.msra.mxu0 %v1757
          %1883 = vmatprep.subr.mxu0 0.0
          %1884 = vmatpush2.msra.mxu0 0.0
          %1885 = vmatprep.subr.mxu0 0.0
          %1886 = vmatpush2.msra.mxu0 0.0
          %1887 = vmatprep.subr.mxu0 0.0
          %1888 = vmatpush2.msra.mxu0 0.0
          %1889 = vmatprep.subr.mxu0 0.0
          %1890 = vmatpush2.msra.mxu0 0.0
          %1891 = vmatprep.subr.mxu0 0.0
          %1892 = vmatpush2.msra.mxu0 0.0
          %1893 = vmatprep.subr.mxu0 0.0
          %1894 = vmatpush2.msra.mxu0 0.0
          %1895 = vmatprep.subr.mxu0 0.0
          %1896 = vmatpush2.msra.mxu0 0.0
          %1897 = vmatprep.subr.mxu0 0.0
          %1898 = vmatpush2.msra.mxu0 0.0
          %1899 = vmatprep.subr.mxu0 0.0
          %1900 = vmatpush2.msra.mxu0 0.0
          %1901 = vmatprep.subr.mxu0 0.0
          %1902 = vmatpush2.msra.mxu0 0.0
          %1903 = vmatprep.subr.mxu0 0.0
          %1904 = vmatpush2.msra.mxu0 0.0
          %1905 = vmatprep.subr.mxu0 0.0
          %1906 = vmatpush2.msra.mxu0 0.0
          %1907 = vmatprep.subr.mxu0 0.0
          %1908 = vmatpush2.msra.mxu0 0.0
          %1909 = vmatprep.subr.mxu0 0.0
          %1910 = vmatpush2.msra.mxu0 0.0
          %1911 = vmatprep.subr.mxu0 0.0
          %1912 = vmatpush2.msra.mxu0 0.0
          %1913 = vmatprep.subr.mxu0 0.0
          %1914 = vmatpush2.msra.mxu0 0.0
          %1915 = vmatprep.mubr.f32.mxu0 0.0
          %1916 = vmatmul.mubr.f32.gmra.mxu0 %v1772
          %v1917 = vpop.f32.mrf.mxu0
          %v1918 = vadd.f32 %v1766, %v1917
          %v1919 = vpop.f32.mrf.mxu0
          %v1920 = vadd.f32 %v1766, %v1919
          %1921 = vmatprep.mubr.f32.mxu0 0.0
          %1922 = vmatmul.mubr.f32.gmra.mxu0 %v1774
          %v1923 = vpop.f32.mrf.mxu0
          %v1924 = vpop.f32.mrf.mxu0
          %1925 = vdwg.mxu0
          %v1926 = vxor.u32 %v1843, 2147483648
          %v1927 = vxor.u32 %v1845, 2147483648
          %v1928 = vxor.u32 %v1918, 2147483648
          %v1929 = vxor.u32 %v1920, 2147483648
          %v1930 = vmul.f32 %v1926, 1.442695
          %v1931 = vpow.pop %v1930
          %v1932 = vmul.f32 %v1927, 1.442695
          %v1933 = vpow.pop %v1932
          %v1934 = vmul.f32 %v1928, 1.442695
          %v1935 = vpow.pop %v1934
          %v1936 = vmul.f32 %v1929, 1.442695
          %v1937 = vpow.pop %v1936
          %v1938 = vadd.f32 %v1931, 1.0
          %v1939 = vadd.f32 %v1933, 1.0
          %v1940 = vadd.f32 %v1935, 1.0
          %v1941 = vadd.f32 %v1937, 1.0
          %v1942 = vrcp.pop %v1938
          %v1943 = vmul.f32 1.0, %v1942
          %v1944 = vrcp.pop %v1939
          %v1945 = vmul.f32 1.0, %v1944
          %v1946 = vrcp.pop %v1940
          %v1947 = vmul.f32 1.0, %v1946
          %v1948 = vrcp.pop %v1941
          %v1949 = vmul.f32 1.0, %v1948
          %v1954 = vcombine.low %v1943, %v1945
          %v1955 = vcombine.low %v1947, %v1949
          %v1957 = vunpack.c.l.s4 1966171168
          %v1958 = vunpack.c.0.s8 %v1957
          %v1959 = vlaneseq
          %v1960 = vshrl.u32 %v1959, 7
          %v1961 = vsub.s32 %v1958, %v1960
          %v1962 = vrot.slane %v1954, %v1961
          %v1964 = vunpack.c.l.s4 1966171168
          %v1965 = vunpack.c.0.s8 %v1964
          %v1966 = vlaneseq
          %v1967 = vshrl.u32 %v1966, 7
          %v1968 = vsub.s32 %v1965, %v1967
          %v1969 = vrot.slane %v1955, %v1968
          %v1970 = vcombine.low %v1962, %v1969
          %v1972 = vunpack.c.l.s4 1966171168
          %v1973 = vunpack.c.0.s8 %v1972
          %v1974 = vlaneseq
          %v1975 = vshrl.u32 %v1974, 7
          %v1976 = vsub.s32 %v1973, %v1975
          %v1977 = vrot.slane %v1970, %v1976
          %v1979 = vlaneseq
          %vm1980 = vcmp.ge.s32.totalorder %v1979, 0
          %vm1981 = vcmp.lt.s32.totalorder %v1979, 512
          %vm1982 = vmand %vm1980, %vm1981
          %1983 = vst.msk [vmem:[#allocation5] sm:$0xf] %vm1982, %v1977
          %v1984 = vld [vmem:[%s944] sm:$0xff]
          %v1985 = vld [vmem:[%s944 + $0x8] sm:$0xff]
          %v1986 = vld [vmem:[%s944 + $0x10] sm:$0xff]
          %v1987 = vld [vmem:[%s944 + $0x18] sm:$0xff]
          %v1988 = vld [vmem:[%s944 + $0x20] sm:$0xff]
          %v1989 = vld [vmem:[%s944 + $0x28] sm:$0xff]
          %v1990 = vld [vmem:[%s944 + $0x30] sm:$0xff]
          %v1991 = vld [vmem:[%s944 + $0x38] sm:$0xff]
          %v1992 = vmul.f32 %v1984, %v1730
          %v1993 = vmul.f32 %v1985, %v1730
          %v1994 = vmul.f32 %v1986, %v1730
          %v1995 = vmul.f32 %v1987, %v1730
          %v1996 = vmul.f32 %v1988, %v1735
          %v1997 = vmul.f32 %v1989, %v1735
          %v1998 = vmul.f32 %v1990, %v1735
          %v1999 = vmul.f32 %v1991, %v1735
          %v2000 = vadd.f32 %v1992, %v1748
          %v2001 = vadd.f32 %v1993, %v1748
          %v2002 = vadd.f32 %v1994, %v1748
          %v2003 = vadd.f32 %v1995, %v1748
          %v2004 = vadd.f32 %v1996, %v1753
          %v2005 = vadd.f32 %v1997, %v1753
          %v2006 = vadd.f32 %v1998, %v1753
          %v2007 = vadd.f32 %v1999, %v1753
          %2008 = vmatprep.subr.mxu0 0.0
          %2009 = vmatpush1.msra.mxu0 0.0
          %2010 = vmatprep.subr.mxu0 0.0
          %2011 = vmatpush1.msra.mxu0 0.0
          %2012 = vmatprep.subr.mxu0 0.0
          %2013 = vmatpush1.msra.mxu0 0.0
          %2014 = vmatprep.subr.mxu0 0.0
          %2015 = vmatpush1.msra.mxu0 0.0
          %2016 = vmatprep.subr.mxu0 0.0
          %2017 = vmatpush1.msra.mxu0 0.0
          %2018 = vmatprep.subr.mxu0 0.0
          %2019 = vmatpush1.msra.mxu0 0.0
          %2020 = vmatprep.subr.mxu0 0.0
          %2021 = vmatpush1.msra.mxu0 0.0
          %2022 = vmatprep.subr.mxu0 0.0
          %2023 = vmatpush1.msra.mxu0 0.0
          %2024 = vmatprep.subr.mxu0 0.0
          %2025 = vmatpush1.msra.mxu0 0.0
          %2026 = vmatprep.subr.mxu0 0.0
          %2027 = vmatpush1.msra.mxu0 0.0
          %2028 = vmatprep.subr.mxu0 0.0
          %2029 = vmatpush1.msra.mxu0 0.0
          %2030 = vmatprep.subr.mxu0 0.0
          %2031 = vmatpush1.msra.mxu0 0.0
          %2032 = vmatprep.subr.mxu0 0.0
          %2033 = vmatpush1.msra.mxu0 0.0
          %2034 = vmatprep.subr.mxu0 0.0
          %2035 = vmatpush1.msra.mxu0 0.0
          %2036 = vmatprep.subr.mxu0 %v2005
          %2037 = vmatpush1.msra.mxu0 %v2004
          %2038 = vmatprep.subr.mxu0 %v2001
          %2039 = vmatpush1.msra.mxu0 %v2000
          %2040 = vmatprep.subr.mxu0 0.0
          %2041 = vmatpush2.msra.mxu0 0.0
          %2042 = vmatprep.subr.mxu0 0.0
          %2043 = vmatpush2.msra.mxu0 0.0
          %2044 = vmatprep.subr.mxu0 0.0
          %2045 = vmatpush2.msra.mxu0 0.0
          %2046 = vmatprep.subr.mxu0 0.0
          %2047 = vmatpush2.msra.mxu0 0.0
          %2048 = vmatprep.subr.mxu0 0.0
          %2049 = vmatpush2.msra.mxu0 0.0
          %2050 = vmatprep.subr.mxu0 0.0
          %2051 = vmatpush2.msra.mxu0 0.0
          %2052 = vmatprep.subr.mxu0 0.0
          %2053 = vmatpush2.msra.mxu0 0.0
          %2054 = vmatprep.subr.mxu0 0.0
          %2055 = vmatpush2.msra.mxu0 0.0
          %2056 = vmatprep.subr.mxu0 0.0
          %2057 = vmatpush2.msra.mxu0 0.0
          %2058 = vmatprep.subr.mxu0 0.0
          %2059 = vmatpush2.msra.mxu0 0.0
          %2060 = vmatprep.subr.mxu0 0.0
          %2061 = vmatpush2.msra.mxu0 0.0
          %2062 = vmatprep.subr.mxu0 0.0
          %2063 = vmatpush2.msra.mxu0 0.0
          %2064 = vmatprep.subr.mxu0 0.0
          %2065 = vmatpush2.msra.mxu0 0.0
          %2066 = vmatprep.subr.mxu0 0.0
          %2067 = vmatpush2.msra.mxu0 0.0
          %2068 = vmatprep.subr.mxu0 0.0
          %2069 = vmatpush2.msra.mxu0 0.0
          %2070 = vmatprep.subr.mxu0 0.0
          %2071 = vmatpush2.msra.mxu0 0.0
          %2072 = vmatprep.mubr.f32.mxu0 0.0
          %2073 = vmatmul.mubr.f32.gmra.mxu0 %v1772
          %v2074 = vpop.f32.mrf.mxu0
          %v2075 = vadd.f32 %v1766, %v2074
          %v2076 = vpop.f32.mrf.mxu0
          %v2077 = vadd.f32 %v1766, %v2076
          %2078 = vmatprep.mubr.f32.mxu0 0.0
          %2079 = vmatmul.mubr.f32.gmra.mxu0 %v1774
          %v2080 = vpop.f32.mrf.mxu0
          %v2081 = vpop.f32.mrf.mxu0
          %2082 = vdwg.mxu0
          %2083 = vmatprep.subr.mxu0 0.0
          %2084 = vmatpush1.msra.mxu0 0.0
          %2085 = vmatprep.subr.mxu0 0.0
          %2086 = vmatpush1.msra.mxu0 0.0
          %2087 = vmatprep.subr.mxu0 0.0
          %2088 = vmatpush1.msra.mxu0 0.0
          %2089 = vmatprep.subr.mxu0 0.0
          %2090 = vmatpush1.msra.mxu0 0.0
          %2091 = vmatprep.subr.mxu0 0.0
          %2092 = vmatpush1.msra.mxu0 0.0
          %2093 = vmatprep.subr.mxu0 0.0
          %2094 = vmatpush1.msra.mxu0 0.0
          %2095 = vmatprep.subr.mxu0 0.0
          %2096 = vmatpush1.msra.mxu0 0.0
          %2097 = vmatprep.subr.mxu0 0.0
          %2098 = vmatpush1.msra.mxu0 0.0
          %2099 = vmatprep.subr.mxu0 0.0
          %2100 = vmatpush1.msra.mxu0 0.0
          %2101 = vmatprep.subr.mxu0 0.0
          %2102 = vmatpush1.msra.mxu0 0.0
          %2103 = vmatprep.subr.mxu0 0.0
          %2104 = vmatpush1.msra.mxu0 0.0
          %2105 = vmatprep.subr.mxu0 0.0
          %2106 = vmatpush1.msra.mxu0 0.0
          %2107 = vmatprep.subr.mxu0 0.0
          %2108 = vmatpush1.msra.mxu0 0.0
          %2109 = vmatprep.subr.mxu0 0.0
          %2110 = vmatpush1.msra.mxu0 0.0
          %2111 = vmatprep.subr.mxu0 %v2007
          %2112 = vmatpush1.msra.mxu0 %v2006
          %2113 = vmatprep.subr.mxu0 %v2003
          %2114 = vmatpush1.msra.mxu0 %v2002
          %2115 = vmatprep.subr.mxu0 0.0
          %2116 = vmatpush2.msra.mxu0 0.0
          %2117 = vmatprep.subr.mxu0 0.0
          %2118 = vmatpush2.msra.mxu0 0.0
          %2119 = vmatprep.subr.mxu0 0.0
          %2120 = vmatpush2.msra.mxu0 0.0
          %2121 = vmatprep.subr.mxu0 0.0
          %2122 = vmatpush2.msra.mxu0 0.0
          %2123 = vmatprep.subr.mxu0 0.0
          %2124 = vmatpush2.msra.mxu0 0.0
          %2125 = vmatprep.subr.mxu0 0.0
          %2126 = vmatpush2.msra.mxu0 0.0
          %2127 = vmatprep.subr.mxu0 0.0
          %2128 = vmatpush2.msra.mxu0 0.0
          %2129 = vmatprep.subr.mxu0 0.0
          %2130 = vmatpush2.msra.mxu0 0.0
          %2131 = vmatprep.subr.mxu0 0.0
          %2132 = vmatpush2.msra.mxu0 0.0
          %2133 = vmatprep.subr.mxu0 0.0
          %2134 = vmatpush2.msra.mxu0 0.0
          %2135 = vmatprep.subr.mxu0 0.0
          %2136 = vmatpush2.msra.mxu0 0.0
          %2137 = vmatprep.subr.mxu0 0.0
          %2138 = vmatpush2.msra.mxu0 0.0
          %2139 = vmatprep.subr.mxu0 0.0
          %2140 = vmatpush2.msra.mxu0 0.0
          %2141 = vmatprep.subr.mxu0 0.0
          %2142 = vmatpush2.msra.mxu0 0.0
          %2143 = vmatprep.subr.mxu0 0.0
          %2144 = vmatpush2.msra.mxu0 0.0
          %2145 = vmatprep.subr.mxu0 0.0
          %2146 = vmatpush2.msra.mxu0 0.0
          %2147 = vmatprep.mubr.f32.mxu0 0.0
          %2148 = vmatmul.mubr.f32.gmra.mxu0 %v1772
          %v2149 = vpop.f32.mrf.mxu0
          %v2150 = vadd.f32 %v1766, %v2149
          %v2151 = vpop.f32.mrf.mxu0
          %v2152 = vadd.f32 %v1766, %v2151
          %2153 = vmatprep.mubr.f32.mxu0 0.0
          %2154 = vmatmul.mubr.f32.gmra.mxu0 %v1774
          %v2155 = vpop.f32.mrf.mxu0
          %v2156 = vpop.f32.mrf.mxu0
          %2157 = vdwg.mxu0
          %v2158 = vxor.u32 %v2075, 2147483648
          %v2159 = vxor.u32 %v2077, 2147483648
          %v2160 = vxor.u32 %v2150, 2147483648
          %v2161 = vxor.u32 %v2152, 2147483648
          %v2162 = vmul.f32 %v2158, 1.442695
          %v2163 = vpow.pop %v2162
          %v2164 = vmul.f32 %v2159, 1.442695
          %v2165 = vpow.pop %v2164
          %v2166 = vmul.f32 %v2160, 1.442695
          %v2167 = vpow.pop %v2166
          %v2168 = vmul.f32 %v2161, 1.442695
          %v2169 = vpow.pop %v2168
          %v2170 = vadd.f32 %v2163, 1.0
          %v2171 = vadd.f32 %v2165, 1.0
          %v2172 = vadd.f32 %v2167, 1.0
          %v2173 = vadd.f32 %v2169, 1.0
          %v2174 = vrcp.pop %v2170
          %v2175 = vmul.f32 1.0, %v2174
          %v2176 = vrcp.pop %v2171
          %v2177 = vmul.f32 1.0, %v2176
          %v2178 = vrcp.pop %v2172
          %v2179 = vmul.f32 1.0, %v2178
          %v2180 = vrcp.pop %v2173
          %v2181 = vmul.f32 1.0, %v2180
          %v2186 = vcombine.low %v2175, %v2177
          %v2187 = vcombine.low %v2179, %v2181
          %v2189 = vunpack.c.l.s4 1966171168
          %v2190 = vunpack.c.0.s8 %v2189
          %v2191 = vlaneseq
          %v2192 = vshrl.u32 %v2191, 7
          %v2193 = vsub.s32 %v2190, %v2192
          %v2194 = vrot.slane %v2186, %v2193
          %v2196 = vunpack.c.l.s4 1966171168
          %v2197 = vunpack.c.0.s8 %v2196
          %v2198 = vlaneseq
          %v2199 = vshrl.u32 %v2198, 7
          %v2200 = vsub.s32 %v2197, %v2199
          %v2201 = vrot.slane %v2187, %v2200
          %v2202 = vcombine.low %v2194, %v2201
          %v2204 = vunpack.c.l.s4 1966171168
          %v2205 = vunpack.c.0.s8 %v2204
          %v2206 = vlaneseq
          %v2207 = vshrl.u32 %v2206, 7
          %v2208 = vsub.s32 %v2205, %v2207
          %v2209 = vrot.slane %v2202, %v2208
          %2211 = vst.msk [vmem:[#allocation5 + $0x4] sm:$0xf] %vm1982, %v2209
        $region36: #{network_sequential_forward.1} parent=27 // pred_fallthru
          _
        // Predicated region
        $region37: #{network_sequential_forward.1} parent=27 // pred_check
          %p2212 = pneg %p74
        $region38: #{network_sequential_forward.1} parent=27 // pred_check_branch
          %2214 = sbr.rel (%p2212) target = $region40
        $region39: #{network_sequential_forward.1} parent=27 // pred_region
          %s2216 = ssub.s32 128, 128
          %2217 = vsyncadd [#allocation6], %s2216
          %s2219 = sshll.u32 [#allocation5], 4
          %s2220 = int_to_ptr.vmem [resolvable:$true] %s2219
          %2222 = dma.vmem_to_hbm [thread:$0]  %s2220, 128, %s2, [#allocation6]
        $region40: #{network_sequential_forward.1} parent=27 // pred_fallthru
          _
        // Predicated region
        $region41: #{network_sequential_forward.1} parent=27 // pred_check
          %p2223 = pneg %p74
        $region42: #{network_sequential_forward.1} parent=27 // pred_check_branch
          %2225 = sbr.rel (%p2223) target = $region44
        $region43: #{network_sequential_forward.1} parent=27 // pred_region
          %2226 = dma.done [#allocation6], 128
        $region44: #{network_sequential_forward.1} parent=27 // pred_fallthru
          _
      $region28: #{network_sequential_forward.1} parent=5 // pred_fallthru
        _
      %p2227 = scmp.le.s32.totalorder 2, %s9
      // Predicated region
      $region45: #{network_sequential_forward.1} parent=5 // pred_check
        %p2228 = pneg %p2227
      $region46: #{network_sequential_forward.1} parent=5 // pred_check_branch
        %2230 = sbr.rel (%p2228) target = $region48
      $region47: #{network_sequential_forward.1} parent=5 // pred_region
        %s2231 = ssub.s32 %s9, 2
      $region48: #{network_sequential_forward.1} parent=5 // pred_fallthru
        _
    $region6: #{network_sequential_forward.1} parent=1 // loop_footer
      %s13 = sadd.s32 1, %s9
    $region7: #{network_sequential_forward.1} parent=1 // loop_footer_branch
      %8 = sbr.rel target = $region3
    $region8: #{network_sequential_forward.1} parent=1 // loop_exit
      _
    %2232 = vsyncpa [#allocation6], 1
    %s2233 = scalar_lea.sflag [#allocation6], 1
    %2234 = vsyncpa %s2233, 1

</llo_original>
